<compile_context>
chip_gen: v5e
topology: v5e:2x2
jax: 0.10.0
libtpu: 0.0.40
codegen_flags: <defaults>
</compile_context>

<pallas_src>
import functools

import jax
import jax.numpy as jnp
import numpy as np
from jax import lax
from jax.experimental import pallas as pl
from jax.experimental.pallas import tpu as pltpu

BN_EPS = 1e-5      # torch.nn.BatchNorm3d default eps
LANE = 128


def _round_up(x, m):
    return (x + m - 1) // m * m


def _choose_m_tiling(m, tm_max):
    """Pick an M tile (lane dim, multiple of 128) and tile count."""
    mp = _round_up(m, LANE)
    if mp <= tm_max:
        return mp, 1
    n_tiles = -(-mp // tm_max)
    tm = _round_up(-(-m // n_tiles), LANE)
    return tm, n_tiles


# ----------------------------------------------------------------------------
# Fused Pallas kernel: conv matmul + BN batch stats + folded affine/bias + ELU
# ----------------------------------------------------------------------------
def _fused_conv_bn_elu_kernel(x_ref, w_ref, g_ref, b_ref, o_ref,
                              y_sc, sum_sc, sq_sc, *, m_real, n_tiles, tm):
    # x_ref: (K, tm) bf16 patch tile        w_ref: (C, K) bf16 (VMEM resident)
    # g_ref: (C, 1) f32 gamma               b_ref: (C, 1) f32 (beta + conv bias)
    # o_ref: (C, Mp) output, VMEM resident across the grid, written at the end
    # y_sc : (n_tiles, C, tm) f32 pre-BN activations
    # sum_sc / sq_sc: (C, 1) f32 per-channel statistics accumulators
    i = pl.program_id(0)

    @pl.when(i == 0)
    def _():
        sum_sc[...] = jnp.zeros_like(sum_sc)
        sq_sc[...] = jnp.zeros_like(sq_sc)

    # Conv as matmul: (C, K) @ (K, tm) -> (C, tm), fp32 MXU accumulation.
    y = jnp.dot(w_ref[...], x_ref[...], preferred_element_type=jnp.float32)

    # BatchNorm batch statistics.  Padded M columns are exact zeros, so they
    # contribute exactly 0 to both sums -> no masking needed.
    sum_sc[...] += jnp.sum(y, axis=1, keepdims=True)
    sq_sc[...] += jnp.sum(y * y, axis=1, keepdims=True)

    # Park the pre-BN tile in VMEM until the statistics are complete.
    y_sc[i] = y

    @pl.when(i == n_tiles - 1)
    def _():
        inv_m = 1.0 / m_real
        mean = sum_sc[...] * inv_m                               # (C, 1)
        var = jnp.maximum(sq_sc[...] * inv_m - mean * mean, 0.0)  # biased var
        inv_std = lax.rsqrt(var + BN_EPS)
        scale = g_ref[...] * inv_std                             # (C, 1)
        shift = b_ref[...] - mean * scale                        # (C, 1)
        # Static unroll over the (few) tiles: affine + ELU, lane-dense store.
        for t in range(n_tiles):
            z = y_sc[t] * scale + shift                          # (C, tm)
            z = jnp.where(z > 0.0, z, jnp.exp(z) - 1.0)          # ELU(alpha=1)
            o_ref[:, t * tm:(t + 1) * tm] = z.astype(o_ref.dtype)


def conv_bn_bias_elu(patches_t, w_mat, gamma, beta_bias, *, out_dtype,
                     tm_max=2048):
    """patches_t: (K, M) bf16; w_mat: (C, K) bf16; gamma/beta_bias: (C, 1) f32.

    Returns the (C, M) post-(BN + bias + ELU) activations in `out_dtype`.
    """
    K, M = patches_t.shape
    C = w_mat.shape[0]
    tm, n_tiles = _choose_m_tiling(M, tm_max)
    Mp = tm * n_tiles

    # Zero-pad M up to the tile grid (zeros are inert in the statistics and
    # are sliced off below).  K and C stay unpadded: full-extent block dims.
    xp = jnp.pad(patches_t, ((0, 0), (0, Mp - M)))

    out = pl.pallas_call(
        functools.partial(_fused_conv_bn_elu_kernel,
                          m_real=float(M), n_tiles=n_tiles, tm=tm),
        grid=(n_tiles,),
        in_specs=[
            pl.BlockSpec((K, tm), lambda i: (0, i)),    # patch stream (1 read)
            pl.BlockSpec((C, K), lambda i: (0, 0)),     # resident weights
            pl.BlockSpec((C, 1), lambda i: (0, 0)),     # resident gamma
            pl.BlockSpec((C, 1), lambda i: (0, 0)),     # resident beta+bias
        ],
        # Full-extent output block with a constant index_map: stays VMEM
        # resident across the grid, fully written in the final sweep, flushed
        # to HBM once -> lane-dense, unpadded store.
        out_specs=pl.BlockSpec((C, Mp), lambda i: (0, 0)),
        out_shape=jax.ShapeDtypeStruct((C, Mp), out_dtype),
        scratch_shapes=[
            pltpu.VMEM((n_tiles, C, tm), jnp.float32),  # pre-BN activations
            pltpu.VMEM((C, 1), jnp.float32),            # per-channel sum
            pltpu.VMEM((C, 1), jnp.float32),            # per-channel sum(x^2)
        ],
        compiler_params=pltpu.CompilerParams(
            dimension_semantics=("arbitrary",)),        # sequential stats pass
    )(xp, w_mat, gamma, beta_bias)
    return out[:, :M]


# ----------------------------------------------------------------------------
# Glue: channels-major im2col, layer / model wrappers
# ----------------------------------------------------------------------------
def im2col_cm(x_cm, kt, kh, kw):
    """Channels-major im2col: x_cm (C, N, T, H, W) -> (C*kt*kh*kw, N*To*Ho*Wo)."""
    C, N, T, H, W = x_cm.shape
    To, Ho, Wo = T - kt + 1, H - kh + 1, W - kw + 1   # padding=0, stride=1
    taps = []
    for dt in range(kt):
        for dy in range(kh):
            for dx in range(kw):
                taps.append(x_cm[:, :, dt:dt + To, dy:dy + Ho, dx:dx + Wo])
    p = jnp.stack(taps, axis=1)                       # (C, kt*kh*kw, N, To, Ho, Wo)
    return p.reshape(C * kt * kh * kw, N * To * Ho * Wo), (N, To, Ho, Wo)


def core_layer_forward(x_cm, p, *, out_dtype):
    # x_cm: (C_in, N, T, H, W) bf16, channels-major.
    c_out, _, kt, kh, kw = p["w_full"].shape
    patches_t, (N, To, Ho, Wo) = im2col_cm(x_cm, kt, kh, kw)     # (K, M) bf16
    # (C_out, C_in, kt, kh, kw) -> (C_out, K): tap order matches im2col_cm.
    w_mat = p["w_full"].reshape(c_out, -1).astype(jnp.bfloat16)
    gamma = p["bn_gamma"].reshape(c_out, 1).astype(jnp.float32)
    beta_bias = (p["bn_beta"] + p["bias"]).reshape(c_out, 1).astype(jnp.float32)
    y = conv_bn_bias_elu(patches_t, w_mat, gamma, beta_bias, out_dtype=out_dtype)
    return y.reshape(c_out, N, To, Ho, Wo)            # next layer's input layout


def core_wrapper_forward(x_ncdhw, params):
    # Single entry transpose + bf16 cast; all layers stay channels-major.
    x = jnp.transpose(x_ncdhw, (1, 0, 2, 3, 4)).astype(jnp.bfloat16)
    for layer_id, p in enumerate(params):
        last = layer_id == len(params) - 1
        x = core_layer_forward(
            x, p, out_dtype=jnp.float32 if last else jnp.bfloat16)
    return jnp.transpose(x, (1, 0, 2, 3, 4))          # single exit transpose (NCDHW)


# ----------------------------------------------------------------------------
# Deterministic synthetic parameter construction (mirrors CoreWrapper.__init__)
# ----------------------------------------------------------------------------
def init_core_params(key, channels, temporal_kernel_sizes, spatial_kernel_sizes):
    params = []
    for layer_id, (cin, cout) in enumerate(zip(channels[:-1], channels[1:])):
        kt = temporal_kernel_sizes[layer_id]
        ks = spatial_kernel_sizes[layer_id]
        key, k1, k2, k3, k4, k5, k6 = jax.random.split(key, 7)

        # STSeparableBatchConv3d: temporal kernel from sin/cos Fourier weights,
        # spatial kernel free, full weight = separable product.
        # TODO(synk): exact openretina temporal Fourier basis (log_speed
        # stretch) is not replicated bit-for-bit; the separable structure is.
        n_basis = max(kt // 2, 1)
        sin_w = 0.1 * jax.random.normal(k1, (cout, cin, n_basis))
        cos_w = 0.1 * jax.random.normal(k2, (cout, cin, n_basis))
        t = jnp.arange(kt, dtype=jnp.float32)
        freqs = jnp.arange(1, n_basis + 1, dtype=jnp.float32)
        sines = jnp.sin(2.0 * jnp.pi * freqs[:, None] * t[None, :] / kt)
        cosines = jnp.cos(2.0 * jnp.pi * freqs[:, None] * t[None, :] / kt)
        w_temporal = (jnp.einsum("oib,bt->oit", sin_w, sines)
                      + jnp.einsum("oib,bt->oit", cos_w, cosines))       # (o,i,kt)
        w_spatial = 0.1 * jax.random.normal(k3, (cout, cin, ks, ks))     # (o,i,ks,ks)
        w_full = (w_temporal[:, :, :, None, None]
                  * w_spatial[:, :, None, :, :])                         # (o,i,kt,ks,ks)

        bn_gamma = 1.0 + 0.1 * jax.random.normal(k4, (1, cout))
        bn_beta = 0.1 * jax.random.normal(k5, (1, cout))
        bias = 0.1 * jax.random.normal(k6, (1, cout))

        params.append({
            "w_full": w_full.astype(jnp.float32),
            "bn_gamma": bn_gamma.astype(jnp.float32),
            "bn_beta": bn_beta.astype(jnp.float32),
            "bias": bias.astype(jnp.float32),
        })
    return params


# ----------------------------------------------------------------------------
# Plain-JAX reference (same bf16-input / fp32-accumulate precision as the
# kernel, so the comparison checks the algorithm, not the dtype choice).
# ----------------------------------------------------------------------------
def reference_forward(x, params):
    for p in params:
        y = lax.conv_general_dilated(
            x.astype(jnp.bfloat16), p["w_full"].astype(jnp.bfloat16),
            window_strides=(1, 1, 1), padding="VALID",
            dimension_numbers=("NCDHW", "OIDHW", "NCDHW"),
            preferred_element_type=jnp.float32)
        mean = jnp.mean(y, axis=(0, 2, 3, 4), keepdims=True)
        var = jnp.mean(jnp.square(y - mean), axis=(0, 2, 3, 4), keepdims=True)
        y = (y - mean) * lax.rsqrt(var + BN_EPS)
        y = y * p["bn_gamma"].reshape(1, -1, 1, 1, 1) + p["bn_beta"].reshape(1, -1, 1, 1, 1)
        y = y + p["bias"].reshape(1, -1, 1, 1, 1)
        x = jnp.where(y > 0, y, jnp.exp(y) - 1.0)
    return x


if __name__ == "__main__":
    key = jax.random.PRNGKey(0)
    kx, kp = jax.random.split(key)

    # CoreWrapper(channels=(4, 8, 8), temporal_kernel_sizes=(3, 2),
    #             spatial_kernel_sizes=(3, 3))
    channels = (4, 8, 8)
    temporal_kernel_sizes = (3, 2)
    spatial_kernel_sizes = (3, 3)

    # Input NCDHW: (batch=2, C_in=4, T=8, H=16, W=16)
    x = jax.random.normal(kx, (2, 4, 8, 16, 16), dtype=jnp.float32)
    params = init_core_params(kp, channels, temporal_kernel_sizes,
                              spatial_kernel_sizes)

    fwd = jax.jit(core_wrapper_forward)
    out = jax.block_until_ready(fwd(x, params))

    ref = jax.block_until_ready(reference_forward(x, params))
    # Tolerance covers fp32 summation-order differences on top of the shared
    # bf16 conv-input precision across two stacked layers.
    np.testing.assert_allclose(np.asarray(out), np.asarray(ref),
                               rtol=5e-3, atol=5e-3)

    print("KERNEL_OK")
</pallas_src>

<mosaic_0001>
module attributes {stable_mosaic.version = 11 : i64} {
  func.func @_fused_conv_bn_elu_kernel(%arg0: i32, %arg1: memref<108x1280xbf16, #tpu.memory_space<vmem>>, %arg2: memref<8x108xbf16, #tpu.memory_space<vmem>>, %arg3: memref<8x1xf32, #tpu.memory_space<vmem>>, %arg4: memref<8x1xf32, #tpu.memory_space<vmem>>, %arg5: memref<8x2560xbf16, #tpu.memory_space<vmem>>, %arg6: memref<2x8x1280xf32, #tpu.memory_space<vmem>>, %arg7: memref<8x1xf32, #tpu.memory_space<vmem>>, %arg8: memref<8x1xf32, #tpu.memory_space<vmem>>) attributes {dimension_semantics = [#tpu.dimension_semantics<arbitrary>], iteration_bounds = array<i64: 2>, scalar_prefetch = 0 : i64, scratch_operands = 3 : i64, tpu.core_type = #tpu.core_type<tc>, window_params = [{transform_indices = @transform_0, window_bounds = array<i64: 108, 1280>}, {pipeline_mode = #tpu.pipeline_mode<synchronous>, transform_indices = @transform_1, window_bounds = array<i64: 8, 108>}, {pipeline_mode = #tpu.pipeline_mode<synchronous>, transform_indices = @transform_2, window_bounds = array<i64: 8, 1>}, {pipeline_mode = #tpu.pipeline_mode<synchronous>, transform_indices = @transform_3, window_bounds = array<i64: 8, 1>}, {pipeline_mode = #tpu.pipeline_mode<synchronous>, transform_indices = @transform_4, window_bounds = array<i64: 8, 2560>}]} {
    %c0_i32 = arith.constant 0 : i32
    %0 = arith.cmpi eq, %arg0, %c0_i32 : i32
    %1 = arith.extui %0 : i1 to i32
    %c0_i32_0 = arith.constant 0 : i32
    %2 = arith.cmpi ne, %1, %c0_i32_0 : i32
    scf.if %2 {
      %cst_17 = arith.constant 0.000000e+00 : f32
      %24 = vector.broadcast %cst_17 : f32 to vector<8x1xf32>
      %c0_18 = arith.constant 0 : index
      %c0_19 = arith.constant 0 : index
      %25 = vector.load %arg7[%c0_18, %c0_19] : memref<8x1xf32, #tpu.memory_space<vmem>>, vector<8x1xf32>
      tpu.vector_store %arg7[%c0_18, %c0_19], %24 {strides = array<i32>} : memref<8x1xf32, #tpu.memory_space<vmem>>, vector<8x1xf32>,
      %cst_20 = arith.constant 0.000000e+00 : f32
      %26 = vector.broadcast %cst_20 : f32 to vector<8x1xf32>
      %c0_21 = arith.constant 0 : index
      %c0_22 = arith.constant 0 : index
      %27 = vector.load %arg8[%c0_21, %c0_22] : memref<8x1xf32, #tpu.memory_space<vmem>>, vector<8x1xf32>
      tpu.vector_store %arg8[%c0_21, %c0_22], %26 {strides = array<i32>} : memref<8x1xf32, #tpu.memory_space<vmem>>, vector<8x1xf32>,
    } else {
    }
    %c0 = arith.constant 0 : index
    %c0_1 = arith.constant 0 : index
    %3 = vector.load %arg2[%c0, %c0_1] : memref<8x108xbf16, #tpu.memory_space<vmem>>, vector<8x108xbf16>
    %c0_2 = arith.constant 0 : index
    %c0_3 = arith.constant 0 : index
    %4 = vector.load %arg1[%c0_2, %c0_3] : memref<108x1280xbf16, #tpu.memory_space<vmem>>, vector<108x1280xbf16>
    %cst = arith.constant dense<0.000000e+00> : vector<8x1280xf32>
    %5 = tpu.matmul %3, %4, %cst {dimension_numbers = #tpu.dot_dimension_numbers<[1], [0], [0], [1], [0, 0, 1, 1], [], []>} : vector<8x108xbf16>, vector<108x1280xbf16>, vector<8x1280xf32> -> vector<8x1280xf32>
    %c0_4 = arith.constant 0 : index
    %c0_5 = arith.constant 0 : index
    %6 = vector.load %arg7[%c0_4, %c0_5] : memref<8x1xf32, #tpu.memory_space<vmem>>, vector<8x1xf32>
    %cst_6 = arith.constant dense<0.000000e+00> : vector<8xf32>
    %7 = vector.multi_reduction <add>, %5, %cst_6 [1] : vector<8x1280xf32> to vector<8xf32>
    %8 = vector.shape_cast %7 : vector<8xf32> to vector<8x1xf32>
    %9 = arith.addf %6, %8 : vector<8x1xf32>
    %c0_7 = arith.constant 0 : index
    %c0_8 = arith.constant 0 : index
    %10 = vector.load %arg7[%c0_7, %c0_8] : memref<8x1xf32, #tpu.memory_space<vmem>>, vector<8x1xf32>
    tpu.vector_store %arg7[%c0_7, %c0_8], %9 {strides = array<i32>} : memref<8x1xf32, #tpu.memory_space<vmem>>, vector<8x1xf32>,
    %c0_9 = arith.constant 0 : index
    %c0_10 = arith.constant 0 : index
    %11 = vector.load %arg8[%c0_9, %c0_10] : memref<8x1xf32, #tpu.memory_space<vmem>>, vector<8x1xf32>
    %12 = arith.mulf %5, %5 : vector<8x1280xf32>
    %cst_11 = arith.constant dense<0.000000e+00> : vector<8xf32>
    %13 = vector.multi_reduction <add>, %12, %cst_11 [1] : vector<8x1280xf32> to vector<8xf32>
    %14 = vector.shape_cast %13 : vector<8xf32> to vector<8x1xf32>
    %15 = arith.addf %11, %14 : vector<8x1xf32>
    %c0_12 = arith.constant 0 : index
    %c0_13 = arith.constant 0 : index
    %16 = vector.load %arg8[%c0_12, %c0_13] : memref<8x1xf32, #tpu.memory_space<vmem>>, vector<8x1xf32>
    tpu.vector_store %arg8[%c0_12, %c0_13], %15 {strides = array<i32>} : memref<8x1xf32, #tpu.memory_space<vmem>>, vector<8x1xf32>,
    %17 = arith.index_cast %arg0 : i32 to index
    %c0_14 = arith.constant 0 : index
    %c0_15 = arith.constant 0 : index
    %18 = vector.load %arg6[%17, %c0_14, %c0_15] : memref<2x8x1280xf32, #tpu.memory_space<vmem>>, vector<1x8x1280xf32>
    %19 = vector.shape_cast %18 : vector<1x8x1280xf32> to vector<8x1280xf32>
    %20 = vector.shape_cast %5 : vector<8x1280xf32> to vector<1x8x1280xf32>
    tpu.vector_store %arg6[%17, %c0_14, %c0_15], %20 {strides = array<i32>} : memref<2x8x1280xf32, #tpu.memory_space<vmem>>, vector<1x8x1280xf32>,
    %c1_i32 = arith.constant 1 : i32
    %21 = arith.cmpi eq, %arg0, %c1_i32 : i32
    %22 = arith.extui %21 : i1 to i32
    %c0_i32_16 = arith.constant 0 : i32
    %23 = arith.cmpi ne, %22, %c0_i32_16 : i32
    scf.if %23 {
      %c0_17 = arith.constant 0 : index
      %c0_18 = arith.constant 0 : index
      %24 = vector.load %arg7[%c0_17, %c0_18] : memref<8x1xf32, #tpu.memory_space<vmem>>, vector<8x1xf32>
      %cst_19 = arith.constant 4.25170059E-4 : f32
      %25 = vector.broadcast %cst_19 : f32 to vector<8x1xf32>
      %26 = arith.mulf %24, %25 : vector<8x1xf32>
      %c0_20 = arith.constant 0 : index
      %c0_21 = arith.constant 0 : index
      %27 = vector.load %arg8[%c0_20, %c0_21] : memref<8x1xf32, #tpu.memory_space<vmem>>, vector<8x1xf32>
      %cst_22 = arith.constant 4.25170059E-4 : f32
      %28 = vector.broadcast %cst_22 : f32 to vector<8x1xf32>
      %29 = arith.mulf %27, %28 : vector<8x1xf32>
      %30 = arith.mulf %26, %26 : vector<8x1xf32>
      %31 = arith.subf %29, %30 : vector<8x1xf32>
      %cst_23 = arith.constant 0.000000e+00 : f32
      %32 = vector.broadcast %cst_23 : f32 to vector<8x1xf32>
      %33 = arith.maximumf %31, %32 : vector<8x1xf32>
      %cst_24 = arith.constant 9.99999974E-6 : f32
      %34 = vector.broadcast %cst_24 : f32 to vector<8x1xf32>
      %35 = arith.addf %33, %34 : vector<8x1xf32>
      %36 = math.rsqrt %35 : vector<8x1xf32>
      %c0_25 = arith.constant 0 : index
      %c0_26 = arith.constant 0 : index
      %37 = vector.load %arg3[%c0_25, %c0_26] : memref<8x1xf32, #tpu.memory_space<vmem>>, vector<8x1xf32>
      %38 = arith.mulf %37, %36 : vector<8x1xf32>
      %c0_27 = arith.constant 0 : index
      %c0_28 = arith.constant 0 : index
      %39 = vector.load %arg4[%c0_27, %c0_28] : memref<8x1xf32, #tpu.memory_space<vmem>>, vector<8x1xf32>
      %40 = arith.mulf %26, %38 : vector<8x1xf32>
      %41 = arith.subf %39, %40 : vector<8x1xf32>
      %c0_29 = arith.constant 0 : index
      %c0_30 = arith.constant 0 : index
      %c0_31 = arith.constant 0 : index
      %42 = vector.load %arg6[%c0_29, %c0_30, %c0_31] : memref<2x8x1280xf32, #tpu.memory_space<vmem>>, vector<1x8x1280xf32>
      %43 = vector.shape_cast %42 : vector<1x8x1280xf32> to vector<8x1280xf32>
      %44 = vector.broadcast %38 : vector<8x1xf32> to vector<8x1280xf32>
      %45 = arith.mulf %43, %44 : vector<8x1280xf32>
      %46 = vector.broadcast %41 : vector<8x1xf32> to vector<8x1280xf32>
      %47 = arith.addf %45, %46 : vector<8x1280xf32>
      %cst_32 = arith.constant 0.000000e+00 : f32
      %48 = vector.broadcast %cst_32 : f32 to vector<8x1280xf32>
      %49 = arith.cmpf ogt, %47, %48 : vector<8x1280xf32>
      %50 = math.exp %47 : vector<8x1280xf32>
      %cst_33 = arith.constant 1.000000e+00 : f32
      %51 = vector.broadcast %cst_33 : f32 to vector<8x1280xf32>
      %52 = arith.subf %50, %51 : vector<8x1280xf32>
      %53 = arith.select %49, %47, %52 : vector<8x1280xi1>, vector<8x1280xf32>
      %54 = arith.truncf %53 : vector<8x1280xf32> to vector<8x1280xbf16>
      %c0_34 = arith.constant 0 : index
      %c0_35 = arith.constant 0 : index
      %55 = vector.load %arg5[%c0_34, %c0_35] : memref<8x2560xbf16, #tpu.memory_space<vmem>>, vector<8x1280xbf16>
      tpu.vector_store %arg5[%c0_34, %c0_35], %54 {strides = array<i32>} : memref<8x2560xbf16, #tpu.memory_space<vmem>>, vector<8x1280xbf16>,
      %c1 = arith.constant 1 : index
      %c0_36 = arith.constant 0 : index
      %c0_37 = arith.constant 0 : index
      %56 = vector.load %arg6[%c1, %c0_36, %c0_37] : memref<2x8x1280xf32, #tpu.memory_space<vmem>>, vector<1x8x1280xf32>
      %57 = vector.shape_cast %56 : vector<1x8x1280xf32> to vector<8x1280xf32>
      %58 = vector.broadcast %38 : vector<8x1xf32> to vector<8x1280xf32>
      %59 = arith.mulf %57, %58 : vector<8x1280xf32>
      %60 = vector.broadcast %41 : vector<8x1xf32> to vector<8x1280xf32>
      %61 = arith.addf %59, %60 : vector<8x1280xf32>
      %cst_38 = arith.constant 0.000000e+00 : f32
      %62 = vector.broadcast %cst_38 : f32 to vector<8x1280xf32>
      %63 = arith.cmpf ogt, %61, %62 : vector<8x1280xf32>
      %64 = math.exp %61 : vector<8x1280xf32>
      %cst_39 = arith.constant 1.000000e+00 : f32
      %65 = vector.broadcast %cst_39 : f32 to vector<8x1280xf32>
      %66 = arith.subf %64, %65 : vector<8x1280xf32>
      %67 = arith.select %63, %61, %66 : vector<8x1280xi1>, vector<8x1280xf32>
      %68 = arith.truncf %67 : vector<8x1280xf32> to vector<8x1280xbf16>
      %c0_40 = arith.constant 0 : index
      %c1280 = arith.constant 1280 : index
      %69 = vector.load %arg5[%c0_40, %c1280] : memref<8x2560xbf16, #tpu.memory_space<vmem>>, vector<8x1280xbf16>
      tpu.vector_store %arg5[%c0_40, %c1280], %68 {strides = array<i32>} : memref<8x2560xbf16, #tpu.memory_space<vmem>>, vector<8x1280xbf16>,
    } else {
    }
    return
  }
  func.func @transform_0(%arg0: i32) -> (i32, i32) {
    %c0_i32 = arith.constant 0 : i32
    %c0_i32_0 = arith.constant 0 : i32
    return %c0_i32, %arg0 : i32, i32
  }
  func.func @transform_1(%arg0: i32) -> (i32, i32) {
    %c0_i32 = arith.constant 0 : i32
    %c0_i32_0 = arith.constant 0 : i32
    %c0_i32_1 = arith.constant 0 : i32
    return %c0_i32, %c0_i32_0 : i32, i32
  }
  func.func @transform_2(%arg0: i32) -> (i32, i32) {
    %c0_i32 = arith.constant 0 : i32
    %c0_i32_0 = arith.constant 0 : i32
    %c0_i32_1 = arith.constant 0 : i32
    return %c0_i32, %c0_i32_0 : i32, i32
  }
  func.func @transform_3(%arg0: i32) -> (i32, i32) {
    %c0_i32 = arith.constant 0 : i32
    %c0_i32_0 = arith.constant 0 : i32
    %c0_i32_1 = arith.constant 0 : i32
    return %c0_i32, %c0_i32_0 : i32, i32
  }
  func.func @transform_4(%arg0: i32) -> (i32, i32) {
    %c0_i32 = arith.constant 0 : i32
    %c0_i32_0 = arith.constant 0 : i32
    %c0_i32_1 = arith.constant 0 : i32
    return %c0_i32, %c0_i32_0 : i32, i32
  }
}

module attributes {stable_mosaic.version = 11 : i64} {
  func.func @_fused_conv_bn_elu_kernel(%arg0: i32, %arg1: memref<144x1536xbf16, #tpu.memory_space<vmem>>, %arg2: memref<8x144xbf16, #tpu.memory_space<vmem>>, %arg3: memref<8x1xf32, #tpu.memory_space<vmem>>, %arg4: memref<8x1xf32, #tpu.memory_space<vmem>>, %arg5: memref<8x1536xf32, #tpu.memory_space<vmem>>, %arg6: memref<1x8x1536xf32, #tpu.memory_space<vmem>>, %arg7: memref<8x1xf32, #tpu.memory_space<vmem>>, %arg8: memref<8x1xf32, #tpu.memory_space<vmem>>) attributes {dimension_semantics = [#tpu.dimension_semantics<arbitrary>], iteration_bounds = array<i64: 1>, scalar_prefetch = 0 : i64, scratch_operands = 3 : i64, tpu.core_type = #tpu.core_type<tc>, window_params = [{transform_indices = @transform_0, window_bounds = array<i64: 144, 1536>}, {pipeline_mode = #tpu.pipeline_mode<synchronous>, transform_indices = @transform_1, window_bounds = array<i64: 8, 144>}, {pipeline_mode = #tpu.pipeline_mode<synchronous>, transform_indices = @transform_2, window_bounds = array<i64: 8, 1>}, {pipeline_mode = #tpu.pipeline_mode<synchronous>, transform_indices = @transform_3, window_bounds = array<i64: 8, 1>}, {pipeline_mode = #tpu.pipeline_mode<synchronous>, transform_indices = @transform_4, window_bounds = array<i64: 8, 1536>}]} {
    %c0_i32 = arith.constant 0 : i32
    %0 = arith.cmpi eq, %arg0, %c0_i32 : i32
    %1 = arith.extui %0 : i1 to i32
    %c0_i32_0 = arith.constant 0 : i32
    %2 = arith.cmpi ne, %1, %c0_i32_0 : i32
    scf.if %2 {
      %cst_18 = arith.constant 0.000000e+00 : f32
      %24 = vector.broadcast %cst_18 : f32 to vector<8x1xf32>
      %c0_19 = arith.constant 0 : index
      %c0_20 = arith.constant 0 : index
      %25 = vector.load %arg7[%c0_19, %c0_20] : memref<8x1xf32, #tpu.memory_space<vmem>>, vector<8x1xf32>
      tpu.vector_store %arg7[%c0_19, %c0_20], %24 {strides = array<i32>} : memref<8x1xf32, #tpu.memory_space<vmem>>, vector<8x1xf32>,
      %cst_21 = arith.constant 0.000000e+00 : f32
      %26 = vector.broadcast %cst_21 : f32 to vector<8x1xf32>
      %c0_22 = arith.constant 0 : index
      %c0_23 = arith.constant 0 : index
      %27 = vector.load %arg8[%c0_22, %c0_23] : memref<8x1xf32, #tpu.memory_space<vmem>>, vector<8x1xf32>
      tpu.vector_store %arg8[%c0_22, %c0_23], %26 {strides = array<i32>} : memref<8x1xf32, #tpu.memory_space<vmem>>, vector<8x1xf32>,
    } else {
    }
    %c0 = arith.constant 0 : index
    %c0_1 = arith.constant 0 : index
    %3 = vector.load %arg2[%c0, %c0_1] : memref<8x144xbf16, #tpu.memory_space<vmem>>, vector<8x144xbf16>
    %c0_2 = arith.constant 0 : index
    %c0_3 = arith.constant 0 : index
    %4 = vector.load %arg1[%c0_2, %c0_3] : memref<144x1536xbf16, #tpu.memory_space<vmem>>, vector<144x1536xbf16>
    %cst = arith.constant dense<0.000000e+00> : vector<8x1536xf32>
    %5 = tpu.matmul %3, %4, %cst {dimension_numbers = #tpu.dot_dimension_numbers<[1], [0], [0], [1], [0, 0, 1, 1], [], []>} : vector<8x144xbf16>, vector<144x1536xbf16>, vector<8x1536xf32> -> vector<8x1536xf32>
    %c0_4 = arith.constant 0 : index
    %c0_5 = arith.constant 0 : index
    %6 = vector.load %arg7[%c0_4, %c0_5] : memref<8x1xf32, #tpu.memory_space<vmem>>, vector<8x1xf32>
    %cst_6 = arith.constant dense<0.000000e+00> : vector<8xf32>
    %7 = vector.multi_reduction <add>, %5, %cst_6 [1] : vector<8x1536xf32> to vector<8xf32>
    %8 = vector.shape_cast %7 : vector<8xf32> to vector<8x1xf32>
    %9 = arith.addf %6, %8 : vector<8x1xf32>
    %c0_7 = arith.constant 0 : index
    %c0_8 = arith.constant 0 : index
    %10 = vector.load %arg7[%c0_7, %c0_8] : memref<8x1xf32, #tpu.memory_space<vmem>>, vector<8x1xf32>
    tpu.vector_store %arg7[%c0_7, %c0_8], %9 {strides = array<i32>} : memref<8x1xf32, #tpu.memory_space<vmem>>, vector<8x1xf32>,
    %c0_9 = arith.constant 0 : index
    %c0_10 = arith.constant 0 : index
    %11 = vector.load %arg8[%c0_9, %c0_10] : memref<8x1xf32, #tpu.memory_space<vmem>>, vector<8x1xf32>
    %12 = arith.mulf %5, %5 : vector<8x1536xf32>
    %cst_11 = arith.constant dense<0.000000e+00> : vector<8xf32>
    %13 = vector.multi_reduction <add>, %12, %cst_11 [1] : vector<8x1536xf32> to vector<8xf32>
    %14 = vector.shape_cast %13 : vector<8xf32> to vector<8x1xf32>
    %15 = arith.addf %11, %14 : vector<8x1xf32>
    %c0_12 = arith.constant 0 : index
    %c0_13 = arith.constant 0 : index
    %16 = vector.load %arg8[%c0_12, %c0_13] : memref<8x1xf32, #tpu.memory_space<vmem>>, vector<8x1xf32>
    tpu.vector_store %arg8[%c0_12, %c0_13], %15 {strides = array<i32>} : memref<8x1xf32, #tpu.memory_space<vmem>>, vector<8x1xf32>,
    %17 = arith.index_cast %arg0 : i32 to index
    %c0_14 = arith.constant 0 : index
    %c0_15 = arith.constant 0 : index
    %18 = vector.load %arg6[%17, %c0_14, %c0_15] : memref<1x8x1536xf32, #tpu.memory_space<vmem>>, vector<1x8x1536xf32>
    %19 = vector.shape_cast %18 : vector<1x8x1536xf32> to vector<8x1536xf32>
    %20 = vector.shape_cast %5 : vector<8x1536xf32> to vector<1x8x1536xf32>
    tpu.vector_store %arg6[%17, %c0_14, %c0_15], %20 {strides = array<i32>} : memref<1x8x1536xf32, #tpu.memory_space<vmem>>, vector<1x8x1536xf32>,
    %c0_i32_16 = arith.constant 0 : i32
    %21 = arith.cmpi eq, %arg0, %c0_i32_16 : i32
    %22 = arith.extui %21 : i1 to i32
    %c0_i32_17 = arith.constant 0 : i32
    %23 = arith.cmpi ne, %22, %c0_i32_17 : i32
    scf.if %23 {
      %c0_18 = arith.constant 0 : index
      %c0_19 = arith.constant 0 : index
      %24 = vector.load %arg7[%c0_18, %c0_19] : memref<8x1xf32, #tpu.memory_space<vmem>>, vector<8x1xf32>
      %cst_20 = arith.constant 6.94444461E-4 : f32
      %25 = vector.broadcast %cst_20 : f32 to vector<8x1xf32>
      %26 = arith.mulf %24, %25 : vector<8x1xf32>
      %c0_21 = arith.constant 0 : index
      %c0_22 = arith.constant 0 : index
      %27 = vector.load %arg8[%c0_21, %c0_22] : memref<8x1xf32, #tpu.memory_space<vmem>>, vector<8x1xf32>
      %cst_23 = arith.constant 6.94444461E-4 : f32
      %28 = vector.broadcast %cst_23 : f32 to vector<8x1xf32>
      %29 = arith.mulf %27, %28 : vector<8x1xf32>
      %30 = arith.mulf %26, %26 : vector<8x1xf32>
      %31 = arith.subf %29, %30 : vector<8x1xf32>
      %cst_24 = arith.constant 0.000000e+00 : f32
      %32 = vector.broadcast %cst_24 : f32 to vector<8x1xf32>
      %33 = arith.maximumf %31, %32 : vector<8x1xf32>
      %cst_25 = arith.constant 9.99999974E-6 : f32
      %34 = vector.broadcast %cst_25 : f32 to vector<8x1xf32>
      %35 = arith.addf %33, %34 : vector<8x1xf32>
      %36 = math.rsqrt %35 : vector<8x1xf32>
      %c0_26 = arith.constant 0 : index
      %c0_27 = arith.constant 0 : index
      %37 = vector.load %arg3[%c0_26, %c0_27] : memref<8x1xf32, #tpu.memory_space<vmem>>, vector<8x1xf32>
      %38 = arith.mulf %37, %36 : vector<8x1xf32>
      %c0_28 = arith.constant 0 : index
      %c0_29 = arith.constant 0 : index
      %39 = vector.load %arg4[%c0_28, %c0_29] : memref<8x1xf32, #tpu.memory_space<vmem>>, vector<8x1xf32>
      %40 = arith.mulf %26, %38 : vector<8x1xf32>
      %41 = arith.subf %39, %40 : vector<8x1xf32>
      %c0_30 = arith.constant 0 : index
      %c0_31 = arith.constant 0 : index
      %c0_32 = arith.constant 0 : index
      %42 = vector.load %arg6[%c0_30, %c0_31, %c0_32] : memref<1x8x1536xf32, #tpu.memory_space<vmem>>, vector<1x8x1536xf32>
      %43 = vector.shape_cast %42 : vector<1x8x1536xf32> to vector<8x1536xf32>
      %44 = vector.broadcast %38 : vector<8x1xf32> to vector<8x1536xf32>
      %45 = arith.mulf %43, %44 : vector<8x1536xf32>
      %46 = vector.broadcast %41 : vector<8x1xf32> to vector<8x1536xf32>
      %47 = arith.addf %45, %46 : vector<8x1536xf32>
      %cst_33 = arith.constant 0.000000e+00 : f32
      %48 = vector.broadcast %cst_33 : f32 to vector<8x1536xf32>
      %49 = arith.cmpf ogt, %47, %48 : vector<8x1536xf32>
      %50 = math.exp %47 : vector<8x1536xf32>
      %cst_34 = arith.constant 1.000000e+00 : f32
      %51 = vector.broadcast %cst_34 : f32 to vector<8x1536xf32>
      %52 = arith.subf %50, %51 : vector<8x1536xf32>
      %53 = arith.select %49, %47, %52 : vector<8x1536xi1>, vector<8x1536xf32>
      %c0_35 = arith.constant 0 : index
      %c0_36 = arith.constant 0 : index
      %54 = vector.load %arg5[%c0_35, %c0_36] : memref<8x1536xf32, #tpu.memory_space<vmem>>, vector<8x1536xf32>
      tpu.vector_store %arg5[%c0_35, %c0_36], %53 {strides = array<i32>} : memref<8x1536xf32, #tpu.memory_space<vmem>>, vector<8x1536xf32>,
    } else {
    }
    return
  }
  func.func @transform_0(%arg0: i32) -> (i32, i32) {
    %c0_i32 = arith.constant 0 : i32
    %c0_i32_0 = arith.constant 0 : i32
    return %c0_i32, %arg0 : i32, i32
  }
  func.func @transform_1(%arg0: i32) -> (i32, i32) {
    %c0_i32 = arith.constant 0 : i32
    %c0_i32_0 = arith.constant 0 : i32
    %c0_i32_1 = arith.constant 0 : i32
    return %c0_i32, %c0_i32_0 : i32, i32
  }
  func.func @transform_2(%arg0: i32) -> (i32, i32) {
    %c0_i32 = arith.constant 0 : i32
    %c0_i32_0 = arith.constant 0 : i32
    %c0_i32_1 = arith.constant 0 : i32
    return %c0_i32, %c0_i32_0 : i32, i32
  }
  func.func @transform_3(%arg0: i32) -> (i32, i32) {
    %c0_i32 = arith.constant 0 : i32
    %c0_i32_0 = arith.constant 0 : i32
    %c0_i32_1 = arith.constant 0 : i32
    return %c0_i32, %c0_i32_0 : i32, i32
  }
  func.func @transform_4(%arg0: i32) -> (i32, i32) {
    %c0_i32 = arith.constant 0 : i32
    %c0_i32_0 = arith.constant 0 : i32
    %c0_i32_1 = arith.constant 0 : i32
    return %c0_i32, %c0_i32_0 : i32, i32
  }
}

</mosaic_0001>

<llo_original>
// kernel: core_wrapper_forward.2
$region0: #{core_wrapper_forward.2}
  #allocation0 [shape = 'u32[]', space=smem, size = 0x4, offset = 0x4, fixed_abs, tag = 'smem constant byte address 0x4 - core index']
  #allocation1 [shape = 'u32[72,128]{1,0:T(1,128)}', space=vmem, size = 0x9000, scoped, tag = 'internal scratch']
  #allocation2 [shape = 'f32[2,8,1280]{2,1,0:T(8,128)}', space=vmem, size = 0x14000, scoped, tag = 'scratch operand']
  #allocation3 [shape = 'f32[8,1]{1,0:T(8,128)}', space=vmem, size = 0x1000, scoped, tag = 'scratch operand']
  #allocation4 [shape = 'f32[8,1]{1,0:T(8,128)}', space=vmem, size = 0x1000, scoped, tag = 'scratch operand']
  %s0 = inlined_call_operand.vmem [shape: bf16[108,2560], index: 0, kind: input, shape index: {}]
  %s1 = inlined_call_operand.vmem [shape: bf16[8,108], index: 1, kind: input, shape index: {}]
  %s2 = inlined_call_operand.vmem [shape: f32[8,1], index: 2, kind: input, shape index: {}]
  %s3 = inlined_call_operand.vmem [shape: f32[8,1], index: 3, kind: input, shape index: {}]
  %s4 = inlined_call_operand.vmem [shape: bf16[8,2560], index: 4, kind: output, shape index: {}]
  %s5 = sld [smem:[#allocation0]]
  $region80: #{core_wrapper_forward.2} parent=0
    _
  %s7 = ssub.s32 1, %s5
  %s8 = scalar_select 0, %s7, %s5
  $region1: #{core_wrapper_forward.2} parent=0
    #allocation5 [shape = 'u8[573440]{0}', space=vmem, size = 0x8c000, scoped, tag = 'input window, operand 0']
    loop: start=0, step=1, limit=4
    $region2: #{core_wrapper_forward.2} parent=1 // loop_pre_header
      _
    $region3: #{core_wrapper_forward.2} parent=1 // loop_header
      %s10 = sphi 0, %s14
      %p11 = scmp.ge.s32.totalorder %s10, 4
      %s20 = sphi 0, %s22
      %s23 = sphi 0, %s20
      %s24 = sphi 0, %s23
      %s40 = sphi 0, %s24
      %s44 = sphi 0, %s44
      %s46 = sphi 0, %s44
      %s47 = sphi 0, %s46
      %s61 = sphi 0, %s47
      %s65 = sphi 0, %s65
      %s67 = sphi 0, %s65
      %s68 = sphi 0, %s67
      %s82 = sphi 0, %s68
      %s86 = sphi 0, %s86
      %s88 = sphi 0, %s86
      %s89 = sphi 0, %s88
      %s103 = sphi 0, %s89
      %s107 = sphi 0, %s107
      %s109 = sphi 0, %s107
      %s110 = sphi 0, %s109
      %s124 = sphi 0, %s110
    $region4: #{core_wrapper_forward.2} parent=1 // loop_header_branch
      %13 = sbr.rel (%p11) target = $region8
    $region5: #{core_wrapper_forward.2} parent=1 // loop_body
      %s15 = ssub.s32 %s10, 1
      %s16 = ssub.s32 %s10, 2
      %s17 = sadd.s32 %s10, 1
      %s18 = ssub.s32 %s10, %s17
      %p19 = scmp.eq.s32.totalorder %s18, 0
      %s21 = sadd.s32 %s20, 1
      %s22 = scalar_select %p19, %s20, %s21
      %p25 = pneg %p19
      %p26 = scmp.eq.s32.totalorder %s10, 1
      %p27 = por %p25, %p26
      %p28 = scmp.ne.s32.totalorder %s20, %s23
      %p29 = scmp.eq.s32.totalorder %s10, 0
      %p30 = por %p28, %p29
      %p31 = scmp.ne.s32.totalorder %s20, %s23
      %p32 = scmp.eq.s32.totalorder %s15, 1
      %p33 = por %p31, %p32
      %p34 = scmp.ne.s32.totalorder %s23, %s24
      %p35 = scmp.eq.s32.totalorder %s15, 0
      %p36 = por %p34, %p35
      %p37 = scmp.ne.s32.totalorder %s23, %s24
      %p38 = scmp.eq.s32.totalorder %s16, 1
      %p39 = por %p37, %p38
      %p41 = scmp.ne.s32.totalorder %s24, %s40
      %p42 = scmp.eq.s32.totalorder %s16, 0
      %p43 = por %p41, %p42
      %s45 = sadd.s32 %s44, 1
      %p48 = scmp.eq.s32.totalorder %s10, 1
      %p49 = scmp.ne.s32.totalorder %s44, %s46
      %p50 = scmp.eq.s32.totalorder %s10, 0
      %p51 = por %p49, %p50
      %p52 = scmp.ne.s32.totalorder %s44, %s46
      %p53 = scmp.eq.s32.totalorder %s15, 1
      %p54 = por %p52, %p53
      %p55 = scmp.ne.s32.totalorder %s46, %s47
      %p56 = scmp.eq.s32.totalorder %s15, 0
      %p57 = por %p55, %p56
      %p58 = scmp.ne.s32.totalorder %s46, %s47
      %p59 = scmp.eq.s32.totalorder %s16, 1
      %p60 = por %p58, %p59
      %p62 = scmp.ne.s32.totalorder %s47, %s61
      %p63 = scmp.eq.s32.totalorder %s16, 0
      %p64 = por %p62, %p63
      %s66 = sadd.s32 %s65, 1
      %p69 = scmp.eq.s32.totalorder %s10, 1
      %p70 = scmp.ne.s32.totalorder %s65, %s67
      %p71 = scmp.eq.s32.totalorder %s10, 0
      %p72 = por %p70, %p71
      %p73 = scmp.ne.s32.totalorder %s65, %s67
      %p74 = scmp.eq.s32.totalorder %s15, 1
      %p75 = por %p73, %p74
      %p76 = scmp.ne.s32.totalorder %s67, %s68
      %p77 = scmp.eq.s32.totalorder %s15, 0
      %p78 = por %p76, %p77
      %p79 = scmp.ne.s32.totalorder %s67, %s68
      %p80 = scmp.eq.s32.totalorder %s16, 1
      %p81 = por %p79, %p80
      %p83 = scmp.ne.s32.totalorder %s68, %s82
      %p84 = scmp.eq.s32.totalorder %s16, 0
      %p85 = por %p83, %p84
      %s87 = sadd.s32 %s86, 1
      %p90 = scmp.eq.s32.totalorder %s10, 1
      %p91 = scmp.ne.s32.totalorder %s86, %s88
      %p92 = scmp.eq.s32.totalorder %s10, 0
      %p93 = por %p91, %p92
      %p94 = scmp.ne.s32.totalorder %s86, %s88
      %p95 = scmp.eq.s32.totalorder %s15, 1
      %p96 = por %p94, %p95
      %p97 = scmp.ne.s32.totalorder %s88, %s89
      %p98 = scmp.eq.s32.totalorder %s15, 0
      %p99 = por %p97, %p98
      %p100 = scmp.ne.s32.totalorder %s88, %s89
      %p101 = scmp.eq.s32.totalorder %s16, 1
      %p102 = por %p100, %p101
      %p104 = scmp.ne.s32.totalorder %s89, %s103
      %p105 = scmp.eq.s32.totalorder %s16, 0
      %p106 = por %p104, %p105
      %s108 = sadd.s32 %s107, 1
      %p111 = scmp.eq.s32.totalorder %s10, 1
      %p112 = scmp.ne.s32.totalorder %s107, %s109
      %p113 = scmp.eq.s32.totalorder %s10, 0
      %p114 = por %p112, %p113
      %p115 = scmp.ne.s32.totalorder %s107, %s109
      %p116 = scmp.eq.s32.totalorder %s15, 1
      %p117 = por %p115, %p116
      %p118 = scmp.ne.s32.totalorder %s109, %s110
      %p119 = scmp.eq.s32.totalorder %s15, 0
      %p120 = por %p118, %p119
      %p121 = scmp.ne.s32.totalorder %s109, %s110
      %p122 = scmp.eq.s32.totalorder %s16, 1
      %p123 = por %p121, %p122
      %p125 = scmp.ne.s32.totalorder %s110, %s124
      %p126 = scmp.eq.s32.totalorder %s16, 0
      %p127 = por %p125, %p126
      %p128 = scmp.le.s32.totalorder 1, %s10
      %p129 = scmp.lt.s32.totalorder %s10, 3
      %p130 = pnand %p128, %p129
      %p131 = pneg %p130
      // Predicated region
      $region9: #{core_wrapper_forward.2} parent=5 // pred_check
        _
      $region10: #{core_wrapper_forward.2} parent=5 // pred_check_branch
        %133 = sbr.rel (%p130) target = $region12
      $region11: #{core_wrapper_forward.2} parent=5 // pred_region
        %s134 = ssub.s32 %s10, 1
        // Predicated region
        $region13: #{core_wrapper_forward.2} parent=11 // pred_check
          %p135 = pneg %p57
        $region14: #{core_wrapper_forward.2} parent=11 // pred_check_branch
          %137 = sbr.rel (%p135) target = $region16
        $region15: #{core_wrapper_forward.2} parent=11 // pred_region
          _
        $region16: #{core_wrapper_forward.2} parent=11 // pred_fallthru
          _
        // Predicated region
        $region17: #{core_wrapper_forward.2} parent=11 // pred_check
          %p138 = pneg %p78
        $region18: #{core_wrapper_forward.2} parent=11 // pred_check_branch
          %140 = sbr.rel (%p138) target = $region20
        $region19: #{core_wrapper_forward.2} parent=11 // pred_region
          _
        $region20: #{core_wrapper_forward.2} parent=11 // pred_fallthru
          _
        // Predicated region
        $region21: #{core_wrapper_forward.2} parent=11 // pred_check
          %p141 = pneg %p99
        $region22: #{core_wrapper_forward.2} parent=11 // pred_check_branch
          %143 = sbr.rel (%p141) target = $region24
        $region23: #{core_wrapper_forward.2} parent=11 // pred_region
          _
        $region24: #{core_wrapper_forward.2} parent=11 // pred_fallthru
          _
      $region12: #{core_wrapper_forward.2} parent=5 // pred_fallthru
        _
      %p144 = scmp.lt.s32.totalorder %s10, 2
      // Predicated region
      $region25: #{core_wrapper_forward.2} parent=5 // pred_check
        %p145 = pneg %p144
      $region26: #{core_wrapper_forward.2} parent=5 // pred_check_branch
        %147 = sbr.rel (%p145) target = $region28
      $region27: #{core_wrapper_forward.2} parent=5 // pred_region
        // Predicated region
        $region29: #{core_wrapper_forward.2} parent=27 // pred_check
          %p148 = pneg %p30
        $region30: #{core_wrapper_forward.2} parent=27 // pred_check_branch
          %150 = sbr.rel (%p148) target = $region32
        $region31: #{core_wrapper_forward.2} parent=27 // pred_region
          %s151 = sand.u32 %s20, 1
          %s152 = sand.u32 %s20, 1
          %s153 = smul.addr %s152, 560
          %s154 = scalar_lea.vmem [#allocation5], %s153
          %s155 = smul.u32 10, %s10
          %s156 = smul.addr %s155, 4
          %s157 = scalar_lea.vmem %s0, %s156
          // Predicated region
          $region33: #{core_wrapper_forward.2} parent=31 // pred_check
            _
          $region34: #{core_wrapper_forward.2} parent=31 // pred_check_branch
            %159 = sbr.rel (0) target = $region36
          $region35: #{core_wrapper_forward.2} parent=31 // pred_region
            // Predicated region
            $region37: #{core_wrapper_forward.2} parent=35 // pred_check
              _
            $region38: #{core_wrapper_forward.2} parent=35 // pred_check_branch
              %161 = sbr.rel (0) target = $region40
            $region39: #{core_wrapper_forward.2} parent=35 // pred_region
              loop: start=0, step=1, limit=1
              $region41: #{core_wrapper_forward.2} parent=39 // loop_pre_header
                _
              $region42: #{core_wrapper_forward.2} parent=39 // loop_header
                %s163 = sphi 0, %s167
                %p164 = scmp.ge.s32.totalorder %s163, 1
                %s168 = sphi %s157, %s157
                %s169 = sphi %s154, %s154
              $region43: #{core_wrapper_forward.2} parent=39 // loop_header_branch
                %166 = sbr.rel (%p164) target = $region47
              $region44: #{core_wrapper_forward.2} parent=39 // loop_body
                %v170 = vld [vmem:[%s168] sm:$0xff]
                %171 = vst [vmem:[%s169] sm:$0xff] %v170
                %v172 = vld [vmem:[%s168 + $0x8] sm:$0xff]
                %173 = vst [vmem:[%s169 + $0x8] sm:$0xff] %v172
                %v174 = vld [vmem:[%s168 + $0x10] sm:$0xff]
                %175 = vst [vmem:[%s169 + $0x10] sm:$0xff] %v174
                %v176 = vld [vmem:[%s168 + $0x18] sm:$0xff]
                %177 = vst [vmem:[%s169 + $0x18] sm:$0xff] %v176
                %v178 = vld [vmem:[%s168 + $0x20] sm:$0xff]
                %179 = vst [vmem:[%s169 + $0x20] sm:$0xff] %v178
                %v180 = vld [vmem:[%s168 + $0x50] sm:$0xff]
                %181 = vst [vmem:[%s169 + $0x28] sm:$0xff] %v180
                %v182 = vld [vmem:[%s168 + $0x58] sm:$0xff]
                %183 = vst [vmem:[%s169 + $0x30] sm:$0xff] %v182
                %v184 = vld [vmem:[%s168 + $0x60] sm:$0xff]
                %185 = vst [vmem:[%s169 + $0x38] sm:$0xff] %v184
                %v186 = vld [vmem:[%s168 + $0x68] sm:$0xff]
                %187 = vst [vmem:[%s169 + $0x40] sm:$0xff] %v186
                %v188 = vld [vmem:[%s168 + $0x70] sm:$0xff]
                %189 = vst [vmem:[%s169 + $0x48] sm:$0xff] %v188
                %v190 = vld [vmem:[%s168 + $0xa0] sm:$0xff]
                %191 = vst [vmem:[%s169 + $0x50] sm:$0xff] %v190
                %v192 = vld [vmem:[%s168 + $0xa8] sm:$0xff]
                %193 = vst [vmem:[%s169 + $0x58] sm:$0xff] %v192
                %v194 = vld [vmem:[%s168 + $0xb0] sm:$0xff]
                %195 = vst [vmem:[%s169 + $0x60] sm:$0xff] %v194
                %v196 = vld [vmem:[%s168 + $0xb8] sm:$0xff]
                %197 = vst [vmem:[%s169 + $0x68] sm:$0xff] %v196
                %v198 = vld [vmem:[%s168 + $0xc0] sm:$0xff]
                %199 = vst [vmem:[%s169 + $0x70] sm:$0xff] %v198
                %v200 = vld [vmem:[%s168 + $0xf0] sm:$0xff]
                %201 = vst [vmem:[%s169 + $0x78] sm:$0xff] %v200
                %v202 = vld [vmem:[%s168 + $0xf8] sm:$0xff]
                %203 = vst [vmem:[%s169 + $0x80] sm:$0xff] %v202
                %v204 = vld [vmem:[%s168 + $0x100] sm:$0xff]
                %205 = vst [vmem:[%s169 + $0x88] sm:$0xff] %v204
                %v206 = vld [vmem:[%s168 + $0x108] sm:$0xff]
                %207 = vst [vmem:[%s169 + $0x90] sm:$0xff] %v206
                %v208 = vld [vmem:[%s168 + $0x110] sm:$0xff]
                %209 = vst [vmem:[%s169 + $0x98] sm:$0xff] %v208
                %v210 = vld [vmem:[%s168 + $0x140] sm:$0xff]
                %211 = vst [vmem:[%s169 + $0xa0] sm:$0xff] %v210
                %v212 = vld [vmem:[%s168 + $0x148] sm:$0xff]
                %213 = vst [vmem:[%s169 + $0xa8] sm:$0xff] %v212
                %v214 = vld [vmem:[%s168 + $0x150] sm:$0xff]
                %215 = vst [vmem:[%s169 + $0xb0] sm:$0xff] %v214
                %v216 = vld [vmem:[%s168 + $0x158] sm:$0xff]
                %217 = vst [vmem:[%s169 + $0xb8] sm:$0xff] %v216
                %v218 = vld [vmem:[%s168 + $0x160] sm:$0xff]
                %219 = vst [vmem:[%s169 + $0xc0] sm:$0xff] %v218
                %v220 = vld [vmem:[%s168 + $0x190] sm:$0xff]
                %221 = vst [vmem:[%s169 + $0xc8] sm:$0xff] %v220
                %v222 = vld [vmem:[%s168 + $0x198] sm:$0xff]
                %223 = vst [vmem:[%s169 + $0xd0] sm:$0xff] %v222
                %v224 = vld [vmem:[%s168 + $0x1a0] sm:$0xff]
                %225 = vst [vmem:[%s169 + $0xd8] sm:$0xff] %v224
                %v226 = vld [vmem:[%s168 + $0x1a8] sm:$0xff]
                %227 = vst [vmem:[%s169 + $0xe0] sm:$0xff] %v226
                %v228 = vld [vmem:[%s168 + $0x1b0] sm:$0xff]
                %229 = vst [vmem:[%s169 + $0xe8] sm:$0xff] %v228
                %v230 = vld [vmem:[%s168 + $0x1e0] sm:$0xff]
                %231 = vst [vmem:[%s169 + $0xf0] sm:$0xff] %v230
                %v232 = vld [vmem:[%s168 + $0x1e8] sm:$0xff]
                %233 = vst [vmem:[%s169 + $0xf8] sm:$0xff] %v232
                %v234 = vld [vmem:[%s168 + $0x1f0] sm:$0xff]
                %235 = vst [vmem:[%s169 + $0x100] sm:$0xff] %v234
                %v236 = vld [vmem:[%s168 + $0x1f8] sm:$0xff]
                %237 = vst [vmem:[%s169 + $0x108] sm:$0xff] %v236
                %v238 = vld [vmem:[%s168 + $0x200] sm:$0xff]
                %239 = vst [vmem:[%s169 + $0x110] sm:$0xff] %v238
                %v240 = vld [vmem:[%s168 + $0x230] sm:$0xff]
                %241 = vst [vmem:[%s169 + $0x118] sm:$0xff] %v240
                %v242 = vld [vmem:[%s168 + $0x238] sm:$0xff]
                %243 = vst [vmem:[%s169 + $0x120] sm:$0xff] %v242
                %v244 = vld [vmem:[%s168 + $0x240] sm:$0xff]
                %245 = vst [vmem:[%s169 + $0x128] sm:$0xff] %v244
                %v246 = vld [vmem:[%s168 + $0x248] sm:$0xff]
                %247 = vst [vmem:[%s169 + $0x130] sm:$0xff] %v246
                %v248 = vld [vmem:[%s168 + $0x250] sm:$0xff]
                %249 = vst [vmem:[%s169 + $0x138] sm:$0xff] %v248
                %v250 = vld [vmem:[%s168 + $0x280] sm:$0xff]
                %251 = vst [vmem:[%s169 + $0x140] sm:$0xff] %v250
                %v252 = vld [vmem:[%s168 + $0x288] sm:$0xff]
                %253 = vst [vmem:[%s169 + $0x148] sm:$0xff] %v252
                %v254 = vld [vmem:[%s168 + $0x290] sm:$0xff]
                %255 = vst [vmem:[%s169 + $0x150] sm:$0xff] %v254
                %v256 = vld [vmem:[%s168 + $0x298] sm:$0xff]
                %257 = vst [vmem:[%s169 + $0x158] sm:$0xff] %v256
                %v258 = vld [vmem:[%s168 + $0x2a0] sm:$0xff]
                %259 = vst [vmem:[%s169 + $0x160] sm:$0xff] %v258
                %v260 = vld [vmem:[%s168 + $0x2d0] sm:$0xff]
                %261 = vst [vmem:[%s169 + $0x168] sm:$0xff] %v260
                %v262 = vld [vmem:[%s168 + $0x2d8] sm:$0xff]
                %263 = vst [vmem:[%s169 + $0x170] sm:$0xff] %v262
                %v264 = vld [vmem:[%s168 + $0x2e0] sm:$0xff]
                %265 = vst [vmem:[%s169 + $0x178] sm:$0xff] %v264
                %v266 = vld [vmem:[%s168 + $0x2e8] sm:$0xff]
                %267 = vst [vmem:[%s169 + $0x180] sm:$0xff] %v266
                %v268 = vld [vmem:[%s168 + $0x2f0] sm:$0xff]
                %269 = vst [vmem:[%s169 + $0x188] sm:$0xff] %v268
                %v270 = vld [vmem:[%s168 + $0x320] sm:$0xff]
                %271 = vst [vmem:[%s169 + $0x190] sm:$0xff] %v270
                %v272 = vld [vmem:[%s168 + $0x328] sm:$0xff]
                %273 = vst [vmem:[%s169 + $0x198] sm:$0xff] %v272
                %v274 = vld [vmem:[%s168 + $0x330] sm:$0xff]
                %275 = vst [vmem:[%s169 + $0x1a0] sm:$0xff] %v274
                %v276 = vld [vmem:[%s168 + $0x338] sm:$0xff]
                %277 = vst [vmem:[%s169 + $0x1a8] sm:$0xff] %v276
                %v278 = vld [vmem:[%s168 + $0x340] sm:$0xff]
                %279 = vst [vmem:[%s169 + $0x1b0] sm:$0xff] %v278
                %v280 = vld [vmem:[%s168 + $0x370] sm:$0xff]
                %281 = vst [vmem:[%s169 + $0x1b8] sm:$0xff] %v280
                %v282 = vld [vmem:[%s168 + $0x378] sm:$0xff]
                %283 = vst [vmem:[%s169 + $0x1c0] sm:$0xff] %v282
                %v284 = vld [vmem:[%s168 + $0x380] sm:$0xff]
                %285 = vst [vmem:[%s169 + $0x1c8] sm:$0xff] %v284
                %v286 = vld [vmem:[%s168 + $0x388] sm:$0xff]
                %287 = vst [vmem:[%s169 + $0x1d0] sm:$0xff] %v286
                %v288 = vld [vmem:[%s168 + $0x390] sm:$0xff]
                %289 = vst [vmem:[%s169 + $0x1d8] sm:$0xff] %v288
                %v290 = vld [vmem:[%s168 + $0x3c0] sm:$0xff]
                %291 = vst [vmem:[%s169 + $0x1e0] sm:$0xff] %v290
                %v292 = vld [vmem:[%s168 + $0x3c8] sm:$0xff]
                %293 = vst [vmem:[%s169 + $0x1e8] sm:$0xff] %v292
                %v294 = vld [vmem:[%s168 + $0x3d0] sm:$0xff]
                %295 = vst [vmem:[%s169 + $0x1f0] sm:$0xff] %v294
                %v296 = vld [vmem:[%s168 + $0x3d8] sm:$0xff]
                %297 = vst [vmem:[%s169 + $0x1f8] sm:$0xff] %v296
                %v298 = vld [vmem:[%s168 + $0x3e0] sm:$0xff]
                %299 = vst [vmem:[%s169 + $0x200] sm:$0xff] %v298
                %v300 = vld [vmem:[%s168 + $0x410] sm:$0xff]
                %301 = vst [vmem:[%s169 + $0x208] sm:$0xff] %v300
                %v302 = vld [vmem:[%s168 + $0x418] sm:$0xff]
                %303 = vst [vmem:[%s169 + $0x210] sm:$0xff] %v302
                %v304 = vld [vmem:[%s168 + $0x420] sm:$0xff]
                %305 = vst [vmem:[%s169 + $0x218] sm:$0xff] %v304
                %v306 = vld [vmem:[%s168 + $0x428] sm:$0xff]
                %307 = vst [vmem:[%s169 + $0x220] sm:$0xff] %v306
                %v308 = vld [vmem:[%s168 + $0x430] sm:$0xff]
                %309 = vst [vmem:[%s169 + $0x228] sm:$0xff] %v308
              $region45: #{core_wrapper_forward.2} parent=39 // loop_footer
                %s167 = sadd.s32 1, %s163
              $region46: #{core_wrapper_forward.2} parent=39 // loop_footer_branch
                %162 = sbr.rel target = $region42
              $region47: #{core_wrapper_forward.2} parent=39 // loop_exit
                _
            $region40: #{core_wrapper_forward.2} parent=35 // pred_fallthru
              _
            // Predicated region
            $region48: #{core_wrapper_forward.2} parent=35 // pred_check
              _
            $region49: #{core_wrapper_forward.2} parent=35 // pred_check_branch
              %311 = sbr.rel target = $region51
            $region50: #{core_wrapper_forward.2} parent=35 // pred_region
              _
            $region51: #{core_wrapper_forward.2} parent=35 // pred_fallthru
              _
          $region36: #{core_wrapper_forward.2} parent=31 // pred_fallthru
            _
          %312 = vnop
        $region32: #{core_wrapper_forward.2} parent=27 // pred_fallthru
          _
      $region28: #{core_wrapper_forward.2} parent=5 // pred_fallthru
        _
      %p313 = scmp.le.s32.totalorder 1, %s10
      %p314 = scmp.lt.s32.totalorder %s10, 3
      %p315 = pnand %p313, %p314
      %p316 = pneg %p315
      // Predicated region
      $region52: #{core_wrapper_forward.2} parent=5 // pred_check
        _
      $region53: #{core_wrapper_forward.2} parent=5 // pred_check_branch
        %318 = sbr.rel (%p315) target = $region55
      $region54: #{core_wrapper_forward.2} parent=5 // pred_region
        %s319 = ssub.s32 %s10, 1
        %s320 = sand.u32 %s23, 1
        %s321 = sand.u32 %s23, 1
        %s322 = smul.addr %s321, 560
        %s323 = scalar_lea.vmem [#allocation5], %s322
        // Predicated region
        $region56: #{core_wrapper_forward.2} parent=54 // pred_check
          %p324 = pneg %p36
        $region57: #{core_wrapper_forward.2} parent=54 // pred_check_branch
          %326 = sbr.rel (%p324) target = $region59
        $region58: #{core_wrapper_forward.2} parent=54 // pred_region
          _
        $region59: #{core_wrapper_forward.2} parent=54 // pred_fallthru
          _
        %s327 = sand.u32 %s23, 1
        %s328 = sand.u32 %s23, 1
        %s329 = smul.addr %s328, 560
        %s330 = scalar_lea.vmem [#allocation5], %s329
        %p331 = pneg %p36
        %p332 = pneg %p33
        %p333 = pneg %p57
        %p334 = pneg %p54
        %p335 = pneg %p78
        %p336 = pneg %p75
        %p337 = pneg %p99
        %p338 = pneg %p96
        %p339 = pneg %p120
        %p340 = pneg %p117
        %s341 = smul.u32 10, %s15
        %p343 = scmp.eq.s32.totalorder %s15, 0
        // Predicated region
        $region60: #{core_wrapper_forward.2} parent=54 // pred_check
          %p344 = pneg %p343
        $region61: #{core_wrapper_forward.2} parent=54 // pred_check_branch
          %346 = sbr.rel (%p344) target = $region63
        $region62: #{core_wrapper_forward.2} parent=54 // pred_region
          %vm347 = vcmask 7168
          %348 = vst.msk [vmem:[#allocation3] sm:$0xff] %vm347, 0.0
          %349 = vst.msk [vmem:[#allocation4] sm:$0xff] %vm347, 0.0
        $region63: #{core_wrapper_forward.2} parent=54 // pred_fallthru
          _
        %v350 = vld [vmem:[%s1] sm:$0xf]
        %v351 = vld [vmem:[%s323] sm:$0xff]
        %v352 = vld [vmem:[%s323 + $0x8] sm:$0xff]
        %v353 = vld [vmem:[%s323 + $0x10] sm:$0xff]
        %v354 = vld [vmem:[%s323 + $0x18] sm:$0xff]
        %v355 = vld [vmem:[%s323 + $0x20] sm:$0xff]
        %v356 = vld [vmem:[%s323 + $0x28] sm:$0xff]
        %v357 = vld [vmem:[%s323 + $0x30] sm:$0xff]
        %v358 = vld [vmem:[%s323 + $0x38] sm:$0xff]
        %v359 = vld [vmem:[%s323 + $0x40] sm:$0xff]
        %v360 = vld [vmem:[%s323 + $0x48] sm:$0xff]
        %v361 = vld [vmem:[%s323 + $0x50] sm:$0xff]
        %v362 = vld [vmem:[%s323 + $0x58] sm:$0xff]
        %v363 = vld [vmem:[%s323 + $0x60] sm:$0xff]
        %v364 = vld [vmem:[%s323 + $0x68] sm:$0xff]
        %v365 = vld [vmem:[%s323 + $0x70] sm:$0xff]
        %v366 = vld [vmem:[%s323 + $0x78] sm:$0xff]
        %v367 = vld [vmem:[%s323 + $0x80] sm:$0xff]
        %v368 = vld [vmem:[%s323 + $0x88] sm:$0xff]
        %v369 = vld [vmem:[%s323 + $0x90] sm:$0xff]
        %v370 = vld [vmem:[%s323 + $0x98] sm:$0xff]
        %v371 = vld [vmem:[%s323 + $0xa0] sm:$0xff]
        %v372 = vld [vmem:[%s323 + $0xa8] sm:$0xff]
        %v373 = vld [vmem:[%s323 + $0xb0] sm:$0xff]
        %v374 = vld [vmem:[%s323 + $0xb8] sm:$0xff]
        %v375 = vld [vmem:[%s323 + $0xc0] sm:$0xff]
        %v376 = vld [vmem:[%s323 + $0xc8] sm:$0xff]
        %v377 = vld [vmem:[%s323 + $0xd0] sm:$0xff]
        %v378 = vld [vmem:[%s323 + $0xd8] sm:$0xff]
        %v379 = vld [vmem:[%s323 + $0xe0] sm:$0xff]
        %v380 = vld [vmem:[%s323 + $0xe8] sm:$0xff]
        %v381 = vld [vmem:[%s323 + $0xf0] sm:$0xff]
        %v382 = vld [vmem:[%s323 + $0xf8] sm:$0xff]
        %v383 = vld [vmem:[%s323 + $0x100] sm:$0xff]
        %v384 = vld [vmem:[%s323 + $0x108] sm:$0xff]
        %v385 = vld [vmem:[%s323 + $0x110] sm:$0xff]
        %v386 = vld [vmem:[%s323 + $0x118] sm:$0xff]
        %v387 = vld [vmem:[%s323 + $0x120] sm:$0xff]
        %v388 = vld [vmem:[%s323 + $0x128] sm:$0xff]
        %v389 = vld [vmem:[%s323 + $0x130] sm:$0xff]
        %v390 = vld [vmem:[%s323 + $0x138] sm:$0xff]
        %v391 = vld [vmem:[%s323 + $0x140] sm:$0xff]
        %v392 = vld [vmem:[%s323 + $0x148] sm:$0xff]
        %v393 = vld [vmem:[%s323 + $0x150] sm:$0xff]
        %v394 = vld [vmem:[%s323 + $0x158] sm:$0xff]
        %v395 = vld [vmem:[%s323 + $0x160] sm:$0xff]
        %v396 = vld [vmem:[%s323 + $0x168] sm:$0xff]
        %v397 = vld [vmem:[%s323 + $0x170] sm:$0xff]
        %v398 = vld [vmem:[%s323 + $0x178] sm:$0xff]
        %v399 = vld [vmem:[%s323 + $0x180] sm:$0xff]
        %v400 = vld [vmem:[%s323 + $0x188] sm:$0xff]
        %v401 = vld [vmem:[%s323 + $0x190] sm:$0xff]
        %v402 = vld [vmem:[%s323 + $0x198] sm:$0xff]
        %v403 = vld [vmem:[%s323 + $0x1a0] sm:$0xff]
        %v404 = vld [vmem:[%s323 + $0x1a8] sm:$0xff]
        %v405 = vld [vmem:[%s323 + $0x1b0] sm:$0xff]
        %v406 = vld [vmem:[%s323 + $0x1b8] sm:$0xff]
        %v407 = vld [vmem:[%s323 + $0x1c0] sm:$0xff]
        %v408 = vld [vmem:[%s323 + $0x1c8] sm:$0xff]
        %v409 = vld [vmem:[%s323 + $0x1d0] sm:$0xff]
        %v410 = vld [vmem:[%s323 + $0x1d8] sm:$0xff]
        %v411 = vld [vmem:[%s323 + $0x1e0] sm:$0xff]
        %v412 = vld [vmem:[%s323 + $0x1e8] sm:$0xff]
        %v413 = vld [vmem:[%s323 + $0x1f0] sm:$0xff]
        %v414 = vld [vmem:[%s323 + $0x1f8] sm:$0xff]
        %v415 = vld [vmem:[%s323 + $0x200] sm:$0xff]
        %v416 = vld [vmem:[%s323 + $0x208] sm:$0x33]
        %v417 = vld [vmem:[%s323 + $0x210] sm:$0x33]
        %v418 = vld [vmem:[%s323 + $0x218] sm:$0x33]
        %v419 = vld [vmem:[%s323 + $0x220] sm:$0x33]
        %v420 = vld [vmem:[%s323 + $0x228] sm:$0x33]
        %v491 = vunpack.c.l.b16 %v351
        %v492 = vunpack.c.h.b16 %v351
        %v493 = vunpack.c.l.b16 %v352
        %v494 = vunpack.c.h.b16 %v352
        %v495 = vunpack.c.l.b16 %v353
        %v496 = vunpack.c.h.b16 %v353
        %v497 = vunpack.c.l.b16 %v354
        %v498 = vunpack.c.h.b16 %v354
        %v499 = vunpack.c.l.b16 %v355
        %v500 = vunpack.c.h.b16 %v355
        %v501 = vunpack.c.l.b16 %v356
        %v502 = vunpack.c.h.b16 %v356
        %v503 = vunpack.c.l.b16 %v357
        %v504 = vunpack.c.h.b16 %v357
        %v505 = vunpack.c.l.b16 %v358
        %v506 = vunpack.c.h.b16 %v358
        %v507 = vunpack.c.l.b16 %v359
        %v508 = vunpack.c.h.b16 %v359
        %v509 = vunpack.c.l.b16 %v360
        %v510 = vunpack.c.h.b16 %v360
        %v511 = vunpack.c.l.b16 %v361
        %v512 = vunpack.c.h.b16 %v361
        %v513 = vunpack.c.l.b16 %v362
        %v514 = vunpack.c.h.b16 %v362
        %v515 = vunpack.c.l.b16 %v363
        %v516 = vunpack.c.h.b16 %v363
        %v517 = vunpack.c.l.b16 %v364
        %v518 = vunpack.c.h.b16 %v364
        %v519 = vunpack.c.l.b16 %v365
        %v520 = vunpack.c.h.b16 %v365
        %v521 = vunpack.c.l.b16 %v366
        %v522 = vunpack.c.h.b16 %v366
        %v523 = vunpack.c.l.b16 %v367
        %v524 = vunpack.c.h.b16 %v367
        %v525 = vunpack.c.l.b16 %v368
        %v526 = vunpack.c.h.b16 %v368
        %v527 = vunpack.c.l.b16 %v369
        %v528 = vunpack.c.h.b16 %v369
        %v529 = vunpack.c.l.b16 %v370
        %v530 = vunpack.c.h.b16 %v370
        %v531 = vunpack.c.l.b16 %v371
        %v532 = vunpack.c.h.b16 %v371
        %v533 = vunpack.c.l.b16 %v372
        %v534 = vunpack.c.h.b16 %v372
        %v535 = vunpack.c.l.b16 %v373
        %v536 = vunpack.c.h.b16 %v373
        %v537 = vunpack.c.l.b16 %v374
        %v538 = vunpack.c.h.b16 %v374
        %v539 = vunpack.c.l.b16 %v375
        %v540 = vunpack.c.h.b16 %v375
        %v541 = vunpack.c.l.b16 %v376
        %v542 = vunpack.c.h.b16 %v376
        %v543 = vunpack.c.l.b16 %v377
        %v544 = vunpack.c.h.b16 %v377
        %v545 = vunpack.c.l.b16 %v378
        %v546 = vunpack.c.h.b16 %v378
        %v547 = vunpack.c.l.b16 %v379
        %v548 = vunpack.c.h.b16 %v379
        %v549 = vunpack.c.l.b16 %v380
        %v550 = vunpack.c.h.b16 %v380
        %v551 = vunpack.c.l.b16 %v381
        %v552 = vunpack.c.h.b16 %v381
        %v553 = vunpack.c.l.b16 %v382
        %v554 = vunpack.c.h.b16 %v382
        %v555 = vunpack.c.l.b16 %v383
        %v556 = vunpack.c.h.b16 %v383
        %v557 = vunpack.c.l.b16 %v384
        %v558 = vunpack.c.h.b16 %v384
        %v559 = vunpack.c.l.b16 %v385
        %v560 = vunpack.c.h.b16 %v385
        %v561 = vunpack.c.l.b16 %v386
        %v562 = vunpack.c.h.b16 %v386
        %v563 = vunpack.c.l.b16 %v387
        %v564 = vunpack.c.h.b16 %v387
        %v565 = vunpack.c.l.b16 %v388
        %v566 = vunpack.c.h.b16 %v388
        %v567 = vunpack.c.l.b16 %v389
        %v568 = vunpack.c.h.b16 %v389
        %v569 = vunpack.c.l.b16 %v390
        %v570 = vunpack.c.h.b16 %v390
        %v571 = vunpack.c.l.b16 %v391
        %v572 = vunpack.c.h.b16 %v391
        %v573 = vunpack.c.l.b16 %v392
        %v574 = vunpack.c.h.b16 %v392
        %v575 = vunpack.c.l.b16 %v393
        %v576 = vunpack.c.h.b16 %v393
        %v577 = vunpack.c.l.b16 %v394
        %v578 = vunpack.c.h.b16 %v394
        %v579 = vunpack.c.l.b16 %v395
        %v580 = vunpack.c.h.b16 %v395
        %v581 = vunpack.c.l.b16 %v396
        %v582 = vunpack.c.h.b16 %v396
        %v583 = vunpack.c.l.b16 %v397
        %v584 = vunpack.c.h.b16 %v397
        %v585 = vunpack.c.l.b16 %v398
        %v586 = vunpack.c.h.b16 %v398
        %v587 = vunpack.c.l.b16 %v399
        %v588 = vunpack.c.h.b16 %v399
        %v589 = vunpack.c.l.b16 %v400
        %v590 = vunpack.c.h.b16 %v400
        %v591 = vunpack.c.l.b16 %v401
        %v592 = vunpack.c.h.b16 %v401
        %v593 = vunpack.c.l.b16 %v402
        %v594 = vunpack.c.h.b16 %v402
        %v595 = vunpack.c.l.b16 %v403
        %v596 = vunpack.c.h.b16 %v403
        %v597 = vunpack.c.l.b16 %v404
        %v598 = vunpack.c.h.b16 %v404
        %v599 = vunpack.c.l.b16 %v405
        %v600 = vunpack.c.h.b16 %v405
        %v601 = vunpack.c.l.b16 %v406
        %v602 = vunpack.c.h.b16 %v406
        %v603 = vunpack.c.l.b16 %v407
        %v604 = vunpack.c.h.b16 %v407
        %v605 = vunpack.c.l.b16 %v408
        %v606 = vunpack.c.h.b16 %v408
        %v607 = vunpack.c.l.b16 %v409
        %v608 = vunpack.c.h.b16 %v409
        %v609 = vunpack.c.l.b16 %v410
        %v610 = vunpack.c.h.b16 %v410
        %v611 = vunpack.c.l.b16 %v411
        %v612 = vunpack.c.h.b16 %v411
        %v613 = vunpack.c.l.b16 %v412
        %v614 = vunpack.c.h.b16 %v412
        %v615 = vunpack.c.l.b16 %v413
        %v616 = vunpack.c.h.b16 %v413
        %v617 = vunpack.c.l.b16 %v414
        %v618 = vunpack.c.h.b16 %v414
        %v619 = vunpack.c.l.b16 %v415
        %v620 = vunpack.c.h.b16 %v415
        %v621 = vunpack.c.l.b16 %v416
        %v622 = vunpack.c.h.b16 %v416
        %v623 = vunpack.c.l.b16 %v417
        %v624 = vunpack.c.h.b16 %v417
        %v625 = vunpack.c.l.b16 %v418
        %v626 = vunpack.c.h.b16 %v418
        %v627 = vunpack.c.l.b16 %v419
        %v628 = vunpack.c.h.b16 %v419
        %v629 = vunpack.c.l.b16 %v420
        %v630 = vunpack.c.h.b16 %v420
        %v631 = vpack.c.b16 %v501, %v491
        %v632 = vpack.c.b16 %v502, %v492
        %v633 = vpack.c.b16 %v503, %v493
        %v634 = vpack.c.b16 %v504, %v494
        %v635 = vpack.c.b16 %v505, %v495
        %v636 = vpack.c.b16 %v506, %v496
        %v637 = vpack.c.b16 %v507, %v497
        %v638 = vpack.c.b16 %v508, %v498
        %v639 = vpack.c.b16 %v509, %v499
        %v640 = vpack.c.b16 %v510, %v500
        %v641 = vpack.c.b16 %v521, %v511
        %v642 = vpack.c.b16 %v522, %v512
        %v643 = vpack.c.b16 %v523, %v513
        %v644 = vpack.c.b16 %v524, %v514
        %v645 = vpack.c.b16 %v525, %v515
        %v646 = vpack.c.b16 %v526, %v516
        %v647 = vpack.c.b16 %v527, %v517
        %v648 = vpack.c.b16 %v528, %v518
        %v649 = vpack.c.b16 %v529, %v519
        %v650 = vpack.c.b16 %v530, %v520
        %v651 = vpack.c.b16 %v541, %v531
        %v652 = vpack.c.b16 %v542, %v532
        %v653 = vpack.c.b16 %v543, %v533
        %v654 = vpack.c.b16 %v544, %v534
        %v655 = vpack.c.b16 %v545, %v535
        %v656 = vpack.c.b16 %v546, %v536
        %v657 = vpack.c.b16 %v547, %v537
        %v658 = vpack.c.b16 %v548, %v538
        %v659 = vpack.c.b16 %v549, %v539
        %v660 = vpack.c.b16 %v550, %v540
        %v661 = vpack.c.b16 %v561, %v551
        %v662 = vpack.c.b16 %v562, %v552
        %v663 = vpack.c.b16 %v563, %v553
        %v664 = vpack.c.b16 %v564, %v554
        %v665 = vpack.c.b16 %v565, %v555
        %v666 = vpack.c.b16 %v566, %v556
        %v667 = vpack.c.b16 %v567, %v557
        %v668 = vpack.c.b16 %v568, %v558
        %v669 = vpack.c.b16 %v569, %v559
        %v670 = vpack.c.b16 %v570, %v560
        %v671 = vpack.c.b16 %v581, %v571
        %v672 = vpack.c.b16 %v582, %v572
        %v673 = vpack.c.b16 %v583, %v573
        %v674 = vpack.c.b16 %v584, %v574
        %v675 = vpack.c.b16 %v585, %v575
        %v676 = vpack.c.b16 %v586, %v576
        %v677 = vpack.c.b16 %v587, %v577
        %v678 = vpack.c.b16 %v588, %v578
        %v679 = vpack.c.b16 %v589, %v579
        %v680 = vpack.c.b16 %v590, %v580
        %v681 = vpack.c.b16 %v601, %v591
        %v682 = vpack.c.b16 %v602, %v592
        %v683 = vpack.c.b16 %v603, %v593
        %v684 = vpack.c.b16 %v604, %v594
        %v685 = vpack.c.b16 %v605, %v595
        %v686 = vpack.c.b16 %v606, %v596
        %v687 = vpack.c.b16 %v607, %v597
        %v688 = vpack.c.b16 %v608, %v598
        %v689 = vpack.c.b16 %v609, %v599
        %v690 = vpack.c.b16 %v610, %v600
        %v691 = vpack.c.b16 %v621, %v611
        %v692 = vpack.c.b16 %v622, %v612
        %v693 = vpack.c.b16 %v623, %v613
        %v694 = vpack.c.b16 %v624, %v614
        %v695 = vpack.c.b16 %v625, %v615
        %v696 = vpack.c.b16 %v626, %v616
        %v697 = vpack.c.b16 %v627, %v617
        %v698 = vpack.c.b16 %v628, %v618
        %v699 = vpack.c.b16 %v629, %v619
        %v700 = vpack.c.b16 %v630, %v620
        %vm761 = vcmask 883712
        %v763 = vsel %vm761, %v350, 0
        %vm765 = vcmask 1045504
        %v767 = vsel %vm765, %v691, 0
        %v770 = vsel %vm765, %v692, 0
        %v773 = vsel %vm765, %v693, 0
        %v776 = vsel %vm765, %v694, 0
        %v779 = vsel %vm765, %v695, 0
        %v782 = vsel %vm765, %v696, 0
        %v785 = vsel %vm765, %v697, 0
        %v788 = vsel %vm765, %v698, 0
        %v791 = vsel %vm765, %v699, 0
        %v794 = vsel %vm765, %v700, 0
        %796 = vmatpush.bf16.msra.mxu0 0
        %797 = vmatpush.bf16.msra.mxu0 %v767
        %798 = vmatpush.bf16.msra.mxu0 %v681
        %799 = vmatpush.bf16.msra.mxu0 %v671
        %800 = vmatpush.bf16.msra.mxu0 %v661
        %801 = vmatpush.bf16.msra.mxu0 %v651
        %802 = vmatpush.bf16.msra.mxu0 %v641
        %803 = vmatpush.bf16.msra.mxu0 %v631
        %804 = vmatmul.bf16.gmra.mxu0 %v763
        %v805 = vpop.f32.mrf.mxu0
        %v806 = vadd.f32 0.0, %v805
        %v807 = vpop.f32.mrf.mxu0
        %808 = vdwg.mxu0
        %809 = vmatpush.bf16.msra.mxu0 0
        %810 = vmatpush.bf16.msra.mxu0 %v770
        %811 = vmatpush.bf16.msra.mxu0 %v682
        %812 = vmatpush.bf16.msra.mxu0 %v672
        %813 = vmatpush.bf16.msra.mxu0 %v662
        %814 = vmatpush.bf16.msra.mxu0 %v652
        %815 = vmatpush.bf16.msra.mxu0 %v642
        %816 = vmatpush.bf16.msra.mxu0 %v632
        %817 = vmatmul.bf16.gmra.mxu0 %v763
        %v818 = vpop.f32.mrf.mxu0
        %v819 = vadd.f32 0.0, %v818
        %v820 = vpop.f32.mrf.mxu0
        %821 = vdwg.mxu0
        %822 = vmatpush.bf16.msra.mxu0 0
        %823 = vmatpush.bf16.msra.mxu0 %v773
        %824 = vmatpush.bf16.msra.mxu0 %v683
        %825 = vmatpush.bf16.msra.mxu0 %v673
        %826 = vmatpush.bf16.msra.mxu0 %v663
        %827 = vmatpush.bf16.msra.mxu0 %v653
        %828 = vmatpush.bf16.msra.mxu0 %v643
        %829 = vmatpush.bf16.msra.mxu0 %v633
        %830 = vmatmul.bf16.gmra.mxu0 %v763
        %v831 = vpop.f32.mrf.mxu0
        %v832 = vadd.f32 0.0, %v831
        %v833 = vpop.f32.mrf.mxu0
        %834 = vdwg.mxu0
        %835 = vmatpush.bf16.msra.mxu0 0
        %836 = vmatpush.bf16.msra.mxu0 %v776
        %837 = vmatpush.bf16.msra.mxu0 %v684
        %838 = vmatpush.bf16.msra.mxu0 %v674
        %839 = vmatpush.bf16.msra.mxu0 %v664
        %840 = vmatpush.bf16.msra.mxu0 %v654
        %841 = vmatpush.bf16.msra.mxu0 %v644
        %842 = vmatpush.bf16.msra.mxu0 %v634
        %843 = vmatmul.bf16.gmra.mxu0 %v763
        %v844 = vpop.f32.mrf.mxu0
        %v845 = vadd.f32 0.0, %v844
        %v846 = vpop.f32.mrf.mxu0
        %847 = vdwg.mxu0
        %848 = vmatpush.bf16.msra.mxu0 0
        %849 = vmatpush.bf16.msra.mxu0 %v779
        %850 = vmatpush.bf16.msra.mxu0 %v685
        %851 = vmatpush.bf16.msra.mxu0 %v675
        %852 = vmatpush.bf16.msra.mxu0 %v665
        %853 = vmatpush.bf16.msra.mxu0 %v655
        %854 = vmatpush.bf16.msra.mxu0 %v645
        %855 = vmatpush.bf16.msra.mxu0 %v635
        %856 = vmatmul.bf16.gmra.mxu0 %v763
        %v857 = vpop.f32.mrf.mxu0
        %v858 = vadd.f32 0.0, %v857
        %v859 = vpop.f32.mrf.mxu0
        %860 = vdwg.mxu0
        %861 = vmatpush.bf16.msra.mxu0 0
        %862 = vmatpush.bf16.msra.mxu0 %v782
        %863 = vmatpush.bf16.msra.mxu0 %v686
        %864 = vmatpush.bf16.msra.mxu0 %v676
        %865 = vmatpush.bf16.msra.mxu0 %v666
        %866 = vmatpush.bf16.msra.mxu0 %v656
        %867 = vmatpush.bf16.msra.mxu0 %v646
        %868 = vmatpush.bf16.msra.mxu0 %v636
        %869 = vmatmul.bf16.gmra.mxu0 %v763
        %v870 = vpop.f32.mrf.mxu0
        %v871 = vadd.f32 0.0, %v870
        %v872 = vpop.f32.mrf.mxu0
        %873 = vdwg.mxu0
        %874 = vmatpush.bf16.msra.mxu0 0
        %875 = vmatpush.bf16.msra.mxu0 %v785
        %876 = vmatpush.bf16.msra.mxu0 %v687
        %877 = vmatpush.bf16.msra.mxu0 %v677
        %878 = vmatpush.bf16.msra.mxu0 %v667
        %879 = vmatpush.bf16.msra.mxu0 %v657
        %880 = vmatpush.bf16.msra.mxu0 %v647
        %881 = vmatpush.bf16.msra.mxu0 %v637
        %882 = vmatmul.bf16.gmra.mxu0 %v763
        %v883 = vpop.f32.mrf.mxu0
        %v884 = vadd.f32 0.0, %v883
        %v885 = vpop.f32.mrf.mxu0
        %886 = vdwg.mxu0
        %887 = vmatpush.bf16.msra.mxu0 0
        %888 = vmatpush.bf16.msra.mxu0 %v788
        %889 = vmatpush.bf16.msra.mxu0 %v688
        %890 = vmatpush.bf16.msra.mxu0 %v678
        %891 = vmatpush.bf16.msra.mxu0 %v668
        %892 = vmatpush.bf16.msra.mxu0 %v658
        %893 = vmatpush.bf16.msra.mxu0 %v648
        %894 = vmatpush.bf16.msra.mxu0 %v638
        %895 = vmatmul.bf16.gmra.mxu0 %v763
        %v896 = vpop.f32.mrf.mxu0
        %v897 = vadd.f32 0.0, %v896
        %v898 = vpop.f32.mrf.mxu0
        %899 = vdwg.mxu0
        %900 = vmatpush.bf16.msra.mxu0 0
        %901 = vmatpush.bf16.msra.mxu0 %v791
        %902 = vmatpush.bf16.msra.mxu0 %v689
        %903 = vmatpush.bf16.msra.mxu0 %v679
        %904 = vmatpush.bf16.msra.mxu0 %v669
        %905 = vmatpush.bf16.msra.mxu0 %v659
        %906 = vmatpush.bf16.msra.mxu0 %v649
        %907 = vmatpush.bf16.msra.mxu0 %v639
        %908 = vmatmul.bf16.gmra.mxu0 %v763
        %v909 = vpop.f32.mrf.mxu0
        %v910 = vadd.f32 0.0, %v909
        %v911 = vpop.f32.mrf.mxu0
        %912 = vdwg.mxu0
        %913 = vmatpush.bf16.msra.mxu0 0
        %914 = vmatpush.bf16.msra.mxu0 %v794
        %915 = vmatpush.bf16.msra.mxu0 %v690
        %916 = vmatpush.bf16.msra.mxu0 %v680
        %917 = vmatpush.bf16.msra.mxu0 %v670
        %918 = vmatpush.bf16.msra.mxu0 %v660
        %919 = vmatpush.bf16.msra.mxu0 %v650
        %920 = vmatpush.bf16.msra.mxu0 %v640
        %921 = vmatmul.bf16.gmra.mxu0 %v763
        %v922 = vpop.f32.mrf.mxu0
        %v923 = vadd.f32 0.0, %v922
        %v924 = vpop.f32.mrf.mxu0
        %925 = vdwg.mxu0
        %v926 = vld [vmem:[#allocation3] sm:$0xff]
        %v927 = vadd.f32 %v806, %v819
        %v928 = vadd.f32 %v927, %v832
        %v929 = vadd.f32 %v928, %v845
        %v930 = vadd.f32 %v929, %v858
        %v931 = vadd.f32 %v930, %v871
        %v932 = vadd.f32 %v931, %v884
        %v933 = vadd.f32 %v932, %v897
        %v934 = vadd.f32 %v933, %v910
        %v935 = vadd.f32 %v934, %v923
        %936 = vadd.xlane.f32.xlu0 %v935
        %v937 = vpop.xlane.xlu0 %936
        %v938 = vadd.f32 %v926, %v937
        %vm939 = vcmask 7168
        %940 = vst.msk [vmem:[#allocation3] sm:$0xff] %vm939, %v938
        %v941 = vld [vmem:[#allocation4] sm:$0xff]
        %v942 = vmul.f32 %v806, %v806
        %v943 = vmul.f32 %v819, %v819
        %v944 = vmul.f32 %v832, %v832
        %v945 = vmul.f32 %v845, %v845
        %v946 = vmul.f32 %v858, %v858
        %v947 = vmul.f32 %v871, %v871
        %v948 = vmul.f32 %v884, %v884
        %v949 = vmul.f32 %v897, %v897
        %v950 = vmul.f32 %v910, %v910
        %v951 = vmul.f32 %v923, %v923
        %v952 = vadd.f32 %v942, %v943
        %v953 = vadd.f32 %v952, %v944
        %v954 = vadd.f32 %v953, %v945
        %v955 = vadd.f32 %v954, %v946
        %v956 = vadd.f32 %v955, %v947
        %v957 = vadd.f32 %v956, %v948
        %v958 = vadd.f32 %v957, %v949
        %v959 = vadd.f32 %v958, %v950
        %v960 = vadd.f32 %v959, %v951
        %961 = vadd.xlane.f32.xlu0 %v960
        %v962 = vpop.xlane.xlu0 %961
        %v963 = vadd.f32 %v941, %v962
        %964 = vst.msk [vmem:[#allocation4] sm:$0xff] %vm939, %v963
        %s965 = smul.u32 %s15, 10
        %s966 = smul.addr %s965, 8
        %s967 = scalar_lea.vmem [#allocation2], %s966
        %968 = vst [vmem:[%s967] sm:$0xff] %v806
        %969 = vst [vmem:[%s967 + $0x8] sm:$0xff] %v819
        %970 = vst [vmem:[%s967 + $0x10] sm:$0xff] %v832
        %971 = vst [vmem:[%s967 + $0x18] sm:$0xff] %v845
        %972 = vst [vmem:[%s967 + $0x20] sm:$0xff] %v858
        %973 = vst [vmem:[%s967 + $0x28] sm:$0xff] %v871
        %974 = vst [vmem:[%s967 + $0x30] sm:$0xff] %v884
        %975 = vst [vmem:[%s967 + $0x38] sm:$0xff] %v897
        %976 = vst [vmem:[%s967 + $0x40] sm:$0xff] %v910
        %977 = vst [vmem:[%s967 + $0x48] sm:$0xff] %v923
        %p978 = scmp.eq.s32.totalorder %s15, 1
        // Predicated region
        $region64: #{core_wrapper_forward.2} parent=54 // pred_check
          %p979 = pneg %p978
        $region65: #{core_wrapper_forward.2} parent=54 // pred_check_branch
          %981 = sbr.rel (%p979) target = $region67
        $region66: #{core_wrapper_forward.2} parent=54 // pred_region
          %v982 = vld [vmem:[#allocation3] sm:$0xff]
          %v983 = vmul.f32 %v982, 0.00042517006
          %v984 = vld [vmem:[#allocation4] sm:$0xff]
          %v985 = vmul.f32 %v984, 0.00042517006
          %v986 = vmul.f32 %v983, %v983
          %v987 = vsub.f32 %v985, %v986
          %v988 = vmax.f32 %v987, 0.0
          %v989 = vadd.f32 %v988, 1e-05
          %v990 = vrsqrt.pop %v989
          %v991 = vmul.f32 %v990, %v989
          %v992 = vmul.f32 %v991, %v990
          %v993 = vmul.f32 0.5, %v992
          %v994 = vsub.f32 1.5, %v993
          %v995 = vmul.f32 %v990, %v994
          %vm996 = vweird.f32 %v989
          %vm997 = vweird.f32 %v990
          %vm998 = vmor %vm996, %vm997
          %v999 = vsel %vm998, %v990, %v995
          %v1000 = vld [vmem:[%s2] sm:$0xff]
          %v1001 = vmul.f32 %v1000, %v999
          %v1002 = vld [vmem:[%s3] sm:$0xff]
          %v1003 = vmul.f32 %v983, %v1001
          %v1004 = vsub.f32 %v1002, %v1003
          %v1005 = vld [vmem:[#allocation2] sm:$0xff]
          %v1006 = vld [vmem:[#allocation2 + $0x8] sm:$0xff]
          %v1007 = vld [vmem:[#allocation2 + $0x10] sm:$0xff]
          %v1008 = vld [vmem:[#allocation2 + $0x18] sm:$0xff]
          %v1009 = vld [vmem:[#allocation2 + $0x20] sm:$0xff]
          %v1010 = vld [vmem:[#allocation2 + $0x28] sm:$0xff]
          %v1011 = vld [vmem:[#allocation2 + $0x30] sm:$0xff]
          %v1012 = vld [vmem:[#allocation2 + $0x38] sm:$0xff]
          %v1013 = vld [vmem:[#allocation2 + $0x40] sm:$0xff]
          %v1014 = vld [vmem:[#allocation2 + $0x48] sm:$0xff]
          %1016 = vset.pattern.permute.xlu0 0
          %1017 = vperm.xlu0 %1016, %v1001
          %v1018 = vpop.permute.xlu0 %1017
          %v1020 = vmul.f32 %v1005, %v1018
          %v1021 = vmul.f32 %v1006, %v1018
          %v1022 = vmul.f32 %v1007, %v1018
          %v1023 = vmul.f32 %v1008, %v1018
          %v1024 = vmul.f32 %v1009, %v1018
          %v1025 = vmul.f32 %v1010, %v1018
          %v1026 = vmul.f32 %v1011, %v1018
          %v1027 = vmul.f32 %v1012, %v1018
          %v1028 = vmul.f32 %v1013, %v1018
          %v1029 = vmul.f32 %v1014, %v1018
          %1031 = vset.pattern.permute.xlu0 0
          %1032 = vperm.xlu0 %1031, %v1004
          %v1033 = vpop.permute.xlu0 %1032
          %v1035 = vadd.f32 %v1020, %v1033
          %v1036 = vadd.f32 %v1021, %v1033
          %v1037 = vadd.f32 %v1022, %v1033
          %v1038 = vadd.f32 %v1023, %v1033
          %v1039 = vadd.f32 %v1024, %v1033
          %v1040 = vadd.f32 %v1025, %v1033
          %v1041 = vadd.f32 %v1026, %v1033
          %v1042 = vadd.f32 %v1027, %v1033
          %v1043 = vadd.f32 %v1028, %v1033
          %v1044 = vadd.f32 %v1029, %v1033
          %vm1045 = vcmp.gt.f32.partialorder %v1035, 0.0
          %vm1046 = vcmp.gt.f32.partialorder %v1036, 0.0
          %vm1047 = vcmp.gt.f32.partialorder %v1037, 0.0
          %vm1048 = vcmp.gt.f32.partialorder %v1038, 0.0
          %vm1049 = vcmp.gt.f32.partialorder %v1039, 0.0
          %vm1050 = vcmp.gt.f32.partialorder %v1040, 0.0
          %vm1051 = vcmp.gt.f32.partialorder %v1041, 0.0
          %vm1052 = vcmp.gt.f32.partialorder %v1042, 0.0
          %vm1053 = vcmp.gt.f32.partialorder %v1043, 0.0
          %vm1054 = vcmp.gt.f32.partialorder %v1044, 0.0
          %v1055 = vmul.f32 %v1035, 1.442695
          %v1056 = vpow.pop %v1055
          %v1057 = vmul.f32 %v1036, 1.442695
          %v1058 = vpow.pop %v1057
          %v1059 = vmul.f32 %v1037, 1.442695
          %v1060 = vpow.pop %v1059
          %v1061 = vmul.f32 %v1038, 1.442695
          %v1062 = vpow.pop %v1061
          %v1063 = vmul.f32 %v1039, 1.442695
          %v1064 = vpow.pop %v1063
          %v1065 = vmul.f32 %v1040, 1.442695
          %v1066 = vpow.pop %v1065
          %v1067 = vmul.f32 %v1041, 1.442695
          %v1068 = vpow.pop %v1067
          %v1069 = vmul.f32 %v1042, 1.442695
          %v1070 = vpow.pop %v1069
          %v1071 = vmul.f32 %v1043, 1.442695
          %v1072 = vpow.pop %v1071
          %v1073 = vmul.f32 %v1044, 1.442695
          %v1074 = vpow.pop %v1073
          %v1075 = vsub.f32 %v1056, 1.0
          %v1076 = vsub.f32 %v1058, 1.0
          %v1077 = vsub.f32 %v1060, 1.0
          %v1078 = vsub.f32 %v1062, 1.0
          %v1079 = vsub.f32 %v1064, 1.0
          %v1080 = vsub.f32 %v1066, 1.0
          %v1081 = vsub.f32 %v1068, 1.0
          %v1082 = vsub.f32 %v1070, 1.0
          %v1083 = vsub.f32 %v1072, 1.0
          %v1084 = vsub.f32 %v1074, 1.0
          %v1085 = vsel %vm1045, %v1035, %v1075
          %v1086 = vsel %vm1046, %v1036, %v1076
          %v1087 = vsel %vm1047, %v1037, %v1077
          %v1088 = vsel %vm1048, %v1038, %v1078
          %v1089 = vsel %vm1049, %v1039, %v1079
          %v1090 = vsel %vm1050, %v1040, %v1080
          %v1091 = vsel %vm1051, %v1041, %v1081
          %v1092 = vsel %vm1052, %v1042, %v1082
          %v1093 = vsel %vm1053, %v1043, %v1083
          %v1094 = vsel %vm1054, %v1044, %v1084
          %v1095 = vpack.c.bf16 %v1086, %v1085
          %v1096 = vpack.c.bf16 %v1088, %v1087
          %v1097 = vpack.c.bf16 %v1090, %v1089
          %v1098 = vpack.c.bf16 %v1092, %v1091
          %v1099 = vpack.c.bf16 %v1094, %v1093
          %1100 = vst [vmem:[%s4] sm:$0xff] %v1095
          %1101 = vst [vmem:[%s4 + $0x8] sm:$0xff] %v1096
          %1102 = vst [vmem:[%s4 + $0x10] sm:$0xff] %v1097
          %1103 = vst [vmem:[%s4 + $0x18] sm:$0xff] %v1098
          %1104 = vst [vmem:[%s4 + $0x20] sm:$0xff] %v1099
          %s1105 = scalar_lea.vmem [#allocation2], 80
          %v1106 = vld [vmem:[%s1105] sm:$0xff]
          %v1107 = vld [vmem:[%s1105 + $0x8] sm:$0xff]
          %v1108 = vld [vmem:[%s1105 + $0x10] sm:$0xff]
          %v1109 = vld [vmem:[%s1105 + $0x18] sm:$0xff]
          %v1110 = vld [vmem:[%s1105 + $0x20] sm:$0xff]
          %v1111 = vld [vmem:[%s1105 + $0x28] sm:$0xff]
          %v1112 = vld [vmem:[%s1105 + $0x30] sm:$0xff]
          %v1113 = vld [vmem:[%s1105 + $0x38] sm:$0xff]
          %v1114 = vld [vmem:[%s1105 + $0x40] sm:$0xff]
          %v1115 = vld [vmem:[%s1105 + $0x48] sm:$0xff]
          %v1116 = vmul.f32 %v1106, %v1018
          %v1117 = vmul.f32 %v1107, %v1018
          %v1118 = vmul.f32 %v1108, %v1018
          %v1119 = vmul.f32 %v1109, %v1018
          %v1120 = vmul.f32 %v1110, %v1018
          %v1121 = vmul.f32 %v1111, %v1018
          %v1122 = vmul.f32 %v1112, %v1018
          %v1123 = vmul.f32 %v1113, %v1018
          %v1124 = vmul.f32 %v1114, %v1018
          %v1125 = vmul.f32 %v1115, %v1018
          %v1126 = vadd.f32 %v1116, %v1033
          %v1127 = vadd.f32 %v1117, %v1033
          %v1128 = vadd.f32 %v1118, %v1033
          %v1129 = vadd.f32 %v1119, %v1033
          %v1130 = vadd.f32 %v1120, %v1033
          %v1131 = vadd.f32 %v1121, %v1033
          %v1132 = vadd.f32 %v1122, %v1033
          %v1133 = vadd.f32 %v1123, %v1033
          %v1134 = vadd.f32 %v1124, %v1033
          %v1135 = vadd.f32 %v1125, %v1033
          %vm1136 = vcmp.gt.f32.partialorder %v1126, 0.0
          %vm1137 = vcmp.gt.f32.partialorder %v1127, 0.0
          %vm1138 = vcmp.gt.f32.partialorder %v1128, 0.0
          %vm1139 = vcmp.gt.f32.partialorder %v1129, 0.0
          %vm1140 = vcmp.gt.f32.partialorder %v1130, 0.0
          %vm1141 = vcmp.gt.f32.partialorder %v1131, 0.0
          %vm1142 = vcmp.gt.f32.partialorder %v1132, 0.0
          %vm1143 = vcmp.gt.f32.partialorder %v1133, 0.0
          %vm1144 = vcmp.gt.f32.partialorder %v1134, 0.0
          %vm1145 = vcmp.gt.f32.partialorder %v1135, 0.0
          %v1146 = vmul.f32 %v1126, 1.442695
          %v1147 = vpow.pop %v1146
          %v1148 = vmul.f32 %v1127, 1.442695
          %v1149 = vpow.pop %v1148
          %v1150 = vmul.f32 %v1128, 1.442695
          %v1151 = vpow.pop %v1150
          %v1152 = vmul.f32 %v1129, 1.442695
          %v1153 = vpow.pop %v1152
          %v1154 = vmul.f32 %v1130, 1.442695
          %v1155 = vpow.pop %v1154
          %v1156 = vmul.f32 %v1131, 1.442695
          %v1157 = vpow.pop %v1156
          %v1158 = vmul.f32 %v1132, 1.442695
          %v1159 = vpow.pop %v1158
          %v1160 = vmul.f32 %v1133, 1.442695
          %v1161 = vpow.pop %v1160
          %v1162 = vmul.f32 %v1134, 1.442695
          %v1163 = vpow.pop %v1162
          %v1164 = vmul.f32 %v1135, 1.442695
          %v1165 = vpow.pop %v1164
          %v1166 = vsub.f32 %v1147, 1.0
          %v1167 = vsub.f32 %v1149, 1.0
          %v1168 = vsub.f32 %v1151, 1.0
          %v1169 = vsub.f32 %v1153, 1.0
          %v1170 = vsub.f32 %v1155, 1.0
          %v1171 = vsub.f32 %v1157, 1.0
          %v1172 = vsub.f32 %v1159, 1.0
          %v1173 = vsub.f32 %v1161, 1.0
          %v1174 = vsub.f32 %v1163, 1.0
          %v1175 = vsub.f32 %v1165, 1.0
          %v1176 = vsel %vm1136, %v1126, %v1166
          %v1177 = vsel %vm1137, %v1127, %v1167
          %v1178 = vsel %vm1138, %v1128, %v1168
          %v1179 = vsel %vm1139, %v1129, %v1169
          %v1180 = vsel %vm1140, %v1130, %v1170
          %v1181 = vsel %vm1141, %v1131, %v1171
          %v1182 = vsel %vm1142, %v1132, %v1172
          %v1183 = vsel %vm1143, %v1133, %v1173
          %v1184 = vsel %vm1144, %v1134, %v1174
          %v1185 = vsel %vm1145, %v1135, %v1175
          %v1186 = vpack.c.bf16 %v1177, %v1176
          %v1187 = vpack.c.bf16 %v1179, %v1178
          %v1188 = vpack.c.bf16 %v1181, %v1180
          %v1189 = vpack.c.bf16 %v1183, %v1182
          %v1190 = vpack.c.bf16 %v1185, %v1184
          %1191 = vst [vmem:[%s4 + $0x28] sm:$0xff] %v1186
          %1192 = vst [vmem:[%s4 + $0x30] sm:$0xff] %v1187
          %1193 = vst [vmem:[%s4 + $0x38] sm:$0xff] %v1188
          %1194 = vst [vmem:[%s4 + $0x40] sm:$0xff] %v1189
          %1195 = vst [vmem:[%s4 + $0x48] sm:$0xff] %v1190
        $region67: #{core_wrapper_forward.2} parent=54 // pred_fallthru
          _
        // Predicated region
        $region68: #{core_wrapper_forward.2} parent=54 // pred_check
          %p1196 = pneg %p117
        $region69: #{core_wrapper_forward.2} parent=54 // pred_check_branch
          %1198 = sbr.rel (%p1196) target = $region71
        $region70: #{core_wrapper_forward.2} parent=54 // pred_region
          _
        $region71: #{core_wrapper_forward.2} parent=54 // pred_fallthru
          _
        // Predicated region
        $region72: #{core_wrapper_forward.2} parent=54 // pred_check
          %p1199 = pneg %p117
        $region73: #{core_wrapper_forward.2} parent=54 // pred_check_branch
          %1201 = sbr.rel (%p1199) target = $region75
        $region74: #{core_wrapper_forward.2} parent=54 // pred_region
          _
        $region75: #{core_wrapper_forward.2} parent=54 // pred_fallthru
          _
      $region55: #{core_wrapper_forward.2} parent=5 // pred_fallthru
        _
      %p1202 = scmp.le.s32.totalorder 2, %s10
      // Predicated region
      $region76: #{core_wrapper_forward.2} parent=5 // pred_check
        %p1203 = pneg %p1202
      $region77: #{core_wrapper_forward.2} parent=5 // pred_check_branch
        %1205 = sbr.rel (%p1203) target = $region79
      $region78: #{core_wrapper_forward.2} parent=5 // pred_region
        %s1206 = ssub.s32 %s10, 2
      $region79: #{core_wrapper_forward.2} parent=5 // pred_fallthru
        _
    $region6: #{core_wrapper_forward.2} parent=1 // loop_footer
      %s14 = sadd.s32 1, %s10
    $region7: #{core_wrapper_forward.2} parent=1 // loop_footer_branch
      %9 = sbr.rel target = $region3
    $region8: #{core_wrapper_forward.2} parent=1 // loop_exit
      _

// kernel: core_wrapper_forward.3
$region0: #{core_wrapper_forward.3}
  #allocation0 [shape = 'u32[]', space=smem, size = 0x4, offset = 0x4, fixed_abs, tag = 'smem constant byte address 0x4 - core index']
  #allocation1 [shape = 'u32[72,128]{1,0:T(1,128)}', space=vmem, size = 0x9000, scoped, tag = 'internal scratch']
  #allocation2 [shape = 'f32[1,8,1536]{2,1,0:T(8,128)}', space=vmem, size = 0xc000, scoped, tag = 'scratch operand']
  #allocation3 [shape = 'f32[8,1]{1,0:T(8,128)}', space=vmem, size = 0x1000, scoped, tag = 'scratch operand']
  #allocation4 [shape = 'f32[8,1]{1,0:T(8,128)}', space=vmem, size = 0x1000, scoped, tag = 'scratch operand']
  %s0 = inlined_call_operand.vmem [shape: bf16[144,1536], index: 0, kind: input, shape index: {}]
  %s1 = inlined_call_operand.vmem [shape: bf16[8,144], index: 1, kind: input, shape index: {}]
  %s2 = inlined_call_operand.vmem [shape: f32[8,1], index: 2, kind: input, shape index: {}]
  %s3 = inlined_call_operand.vmem [shape: f32[8,1], index: 3, kind: input, shape index: {}]
  %s4 = inlined_call_operand.vmem [shape: f32[8,1536], index: 4, kind: output, shape index: {}]
  %s5 = sld [smem:[#allocation0]]
  $region34: #{core_wrapper_forward.3} parent=0
    _
  %s7 = ssub.s32 1, %s5
  %s8 = scalar_select 0, %s7, %s5
  // Predicated region
  $region2: #{core_wrapper_forward.3} parent=0 // pred_check
    _
  $region3: #{core_wrapper_forward.3} parent=0 // pred_check_branch
    %10 = sbr.rel (0) target = $region5
  $region4: #{core_wrapper_forward.3} parent=0 // pred_region
    _
  $region5: #{core_wrapper_forward.3} parent=0 // pred_fallthru
    _
  // Predicated region
  $region6: #{core_wrapper_forward.3} parent=0 // pred_check
    _
  $region7: #{core_wrapper_forward.3} parent=0 // pred_check_branch
    %12 = sbr.rel (0) target = $region9
  $region8: #{core_wrapper_forward.3} parent=0 // pred_region
    _
  $region9: #{core_wrapper_forward.3} parent=0 // pred_fallthru
    _
  // Predicated region
  $region10: #{core_wrapper_forward.3} parent=0 // pred_check
    _
  $region11: #{core_wrapper_forward.3} parent=0 // pred_check_branch
    %14 = sbr.rel (0) target = $region13
  $region12: #{core_wrapper_forward.3} parent=0 // pred_region
    _
  $region13: #{core_wrapper_forward.3} parent=0 // pred_fallthru
    _
  // Predicated region
  $region14: #{core_wrapper_forward.3} parent=0 // pred_check
    _
  $region15: #{core_wrapper_forward.3} parent=0 // pred_check_branch
    %16 = sbr.rel (0) target = $region17
  $region16: #{core_wrapper_forward.3} parent=0 // pred_region
    _
  $region17: #{core_wrapper_forward.3} parent=0 // pred_fallthru
    _
  %p18 = scmp.eq.s32.totalorder 0, 0
  // Predicated region
  $region18: #{core_wrapper_forward.3} parent=0 // pred_check
    %p19 = pneg %p18
  $region19: #{core_wrapper_forward.3} parent=0 // pred_check_branch
    %21 = sbr.rel (%p19) target = $region21
  $region20: #{core_wrapper_forward.3} parent=0 // pred_region
    %vm22 = vcmask 7168
    %23 = vst.msk [vmem:[#allocation3] sm:$0xff] %vm22, 0.0
    %24 = vst.msk [vmem:[#allocation4] sm:$0xff] %vm22, 0.0
  $region21: #{core_wrapper_forward.3} parent=0 // pred_fallthru
    _
  %v25 = vld [vmem:[%s1] sm:$0xff]
  %v26 = vld [vmem:[%s0] sm:$0xff]
  %v27 = vld [vmem:[%s0 + $0x8] sm:$0xff]
  %v28 = vld [vmem:[%s0 + $0x10] sm:$0xff]
  %v29 = vld [vmem:[%s0 + $0x18] sm:$0xff]
  %v30 = vld [vmem:[%s0 + $0x20] sm:$0xff]
  %v31 = vld [vmem:[%s0 + $0x28] sm:$0xff]
  %v32 = vld [vmem:[%s0 + $0x30] sm:$0xff]
  %v33 = vld [vmem:[%s0 + $0x38] sm:$0xff]
  %v34 = vld [vmem:[%s0 + $0x40] sm:$0xff]
  %v35 = vld [vmem:[%s0 + $0x48] sm:$0xff]
  %v36 = vld [vmem:[%s0 + $0x50] sm:$0xff]
  %v37 = vld [vmem:[%s0 + $0x58] sm:$0xff]
  %v38 = vld [vmem:[%s0 + $0x60] sm:$0xff]
  %v39 = vld [vmem:[%s0 + $0x68] sm:$0xff]
  %v40 = vld [vmem:[%s0 + $0x70] sm:$0xff]
  %v41 = vld [vmem:[%s0 + $0x78] sm:$0xff]
  %v42 = vld [vmem:[%s0 + $0x80] sm:$0xff]
  %v43 = vld [vmem:[%s0 + $0x88] sm:$0xff]
  %v44 = vld [vmem:[%s0 + $0x90] sm:$0xff]
  %v45 = vld [vmem:[%s0 + $0x98] sm:$0xff]
  %v46 = vld [vmem:[%s0 + $0xa0] sm:$0xff]
  %v47 = vld [vmem:[%s0 + $0xa8] sm:$0xff]
  %v48 = vld [vmem:[%s0 + $0xb0] sm:$0xff]
  %v49 = vld [vmem:[%s0 + $0xb8] sm:$0xff]
  %v50 = vld [vmem:[%s0 + $0xc0] sm:$0xff]
  %v51 = vld [vmem:[%s0 + $0xc8] sm:$0xff]
  %v52 = vld [vmem:[%s0 + $0xd0] sm:$0xff]
  %v53 = vld [vmem:[%s0 + $0xd8] sm:$0xff]
  %v54 = vld [vmem:[%s0 + $0xe0] sm:$0xff]
  %v55 = vld [vmem:[%s0 + $0xe8] sm:$0xff]
  %v56 = vld [vmem:[%s0 + $0xf0] sm:$0xff]
  %v57 = vld [vmem:[%s0 + $0xf8] sm:$0xff]
  %v58 = vld [vmem:[%s0 + $0x100] sm:$0xff]
  %v59 = vld [vmem:[%s0 + $0x108] sm:$0xff]
  %v60 = vld [vmem:[%s0 + $0x110] sm:$0xff]
  %v61 = vld [vmem:[%s0 + $0x118] sm:$0xff]
  %v62 = vld [vmem:[%s0 + $0x120] sm:$0xff]
  %v63 = vld [vmem:[%s0 + $0x128] sm:$0xff]
  %v64 = vld [vmem:[%s0 + $0x130] sm:$0xff]
  %v65 = vld [vmem:[%s0 + $0x138] sm:$0xff]
  %v66 = vld [vmem:[%s0 + $0x140] sm:$0xff]
  %v67 = vld [vmem:[%s0 + $0x148] sm:$0xff]
  %v68 = vld [vmem:[%s0 + $0x150] sm:$0xff]
  %v69 = vld [vmem:[%s0 + $0x158] sm:$0xff]
  %v70 = vld [vmem:[%s0 + $0x160] sm:$0xff]
  %v71 = vld [vmem:[%s0 + $0x168] sm:$0xff]
  %v72 = vld [vmem:[%s0 + $0x170] sm:$0xff]
  %v73 = vld [vmem:[%s0 + $0x178] sm:$0xff]
  %v74 = vld [vmem:[%s0 + $0x180] sm:$0xff]
  %v75 = vld [vmem:[%s0 + $0x188] sm:$0xff]
  %v76 = vld [vmem:[%s0 + $0x190] sm:$0xff]
  %v77 = vld [vmem:[%s0 + $0x198] sm:$0xff]
  %v78 = vld [vmem:[%s0 + $0x1a0] sm:$0xff]
  %v79 = vld [vmem:[%s0 + $0x1a8] sm:$0xff]
  %v80 = vld [vmem:[%s0 + $0x1b0] sm:$0xff]
  %v81 = vld [vmem:[%s0 + $0x1b8] sm:$0xff]
  %v82 = vld [vmem:[%s0 + $0x1c0] sm:$0xff]
  %v83 = vld [vmem:[%s0 + $0x1c8] sm:$0xff]
  %v84 = vld [vmem:[%s0 + $0x1d0] sm:$0xff]
  %v85 = vld [vmem:[%s0 + $0x1d8] sm:$0xff]
  %v86 = vld [vmem:[%s0 + $0x1e0] sm:$0xff]
  %v87 = vld [vmem:[%s0 + $0x1e8] sm:$0xff]
  %v88 = vld [vmem:[%s0 + $0x1f0] sm:$0xff]
  %v89 = vld [vmem:[%s0 + $0x1f8] sm:$0xff]
  %v90 = vld [vmem:[%s0 + $0x200] sm:$0xff]
  %v91 = vld [vmem:[%s0 + $0x208] sm:$0xff]
  %v92 = vld [vmem:[%s0 + $0x210] sm:$0xff]
  %v93 = vld [vmem:[%s0 + $0x218] sm:$0xff]
  %v94 = vld [vmem:[%s0 + $0x220] sm:$0xff]
  %v95 = vld [vmem:[%s0 + $0x228] sm:$0xff]
  %v96 = vld [vmem:[%s0 + $0x230] sm:$0xff]
  %v97 = vld [vmem:[%s0 + $0x238] sm:$0xff]
  %v98 = vld [vmem:[%s0 + $0x240] sm:$0xff]
  %v99 = vld [vmem:[%s0 + $0x248] sm:$0xff]
  %v100 = vld [vmem:[%s0 + $0x250] sm:$0xff]
  %v101 = vld [vmem:[%s0 + $0x258] sm:$0xff]
  %v102 = vld [vmem:[%s0 + $0x260] sm:$0xff]
  %v103 = vld [vmem:[%s0 + $0x268] sm:$0xff]
  %v104 = vld [vmem:[%s0 + $0x270] sm:$0xff]
  %v105 = vld [vmem:[%s0 + $0x278] sm:$0xff]
  %v106 = vld [vmem:[%s0 + $0x280] sm:$0xff]
  %v107 = vld [vmem:[%s0 + $0x288] sm:$0xff]
  %v108 = vld [vmem:[%s0 + $0x290] sm:$0xff]
  %v109 = vld [vmem:[%s0 + $0x298] sm:$0xff]
  %v110 = vld [vmem:[%s0 + $0x2a0] sm:$0xff]
  %v111 = vld [vmem:[%s0 + $0x2a8] sm:$0xff]
  %v112 = vld [vmem:[%s0 + $0x2b0] sm:$0xff]
  %v113 = vld [vmem:[%s0 + $0x2b8] sm:$0xff]
  %v114 = vld [vmem:[%s0 + $0x2c0] sm:$0xff]
  %v115 = vld [vmem:[%s0 + $0x2c8] sm:$0xff]
  %v116 = vld [vmem:[%s0 + $0x2d0] sm:$0xff]
  %v117 = vld [vmem:[%s0 + $0x2d8] sm:$0xff]
  %v118 = vld [vmem:[%s0 + $0x2e0] sm:$0xff]
  %v119 = vld [vmem:[%s0 + $0x2e8] sm:$0xff]
  %v120 = vld [vmem:[%s0 + $0x2f0] sm:$0xff]
  %v121 = vld [vmem:[%s0 + $0x2f8] sm:$0xff]
  %v122 = vld [vmem:[%s0 + $0x300] sm:$0xff]
  %v123 = vld [vmem:[%s0 + $0x308] sm:$0xff]
  %v124 = vld [vmem:[%s0 + $0x310] sm:$0xff]
  %v125 = vld [vmem:[%s0 + $0x318] sm:$0xff]
  %v126 = vld [vmem:[%s0 + $0x320] sm:$0xff]
  %v127 = vld [vmem:[%s0 + $0x328] sm:$0xff]
  %v128 = vld [vmem:[%s0 + $0x330] sm:$0xff]
  %v129 = vld [vmem:[%s0 + $0x338] sm:$0xff]
  %v130 = vld [vmem:[%s0 + $0x340] sm:$0xff]
  %v131 = vld [vmem:[%s0 + $0x348] sm:$0xff]
  %v132 = vld [vmem:[%s0 + $0x350] sm:$0xff]
  %v133 = vld [vmem:[%s0 + $0x358] sm:$0xff]
  %v135 = vunpack.c.l.b16 %v25
  %v136 = vunpack.c.h.b16 %v25
  %v137 = vpack.c.b16 %v135, %v135
  %v138 = vpack.c.b16 %v136, %v136
  %v248 = vunpack.c.l.b16 %v26
  %v249 = vunpack.c.h.b16 %v26
  %v250 = vunpack.c.l.b16 %v27
  %v251 = vunpack.c.h.b16 %v27
  %v252 = vunpack.c.l.b16 %v28
  %v253 = vunpack.c.h.b16 %v28
  %v254 = vunpack.c.l.b16 %v29
  %v255 = vunpack.c.h.b16 %v29
  %v256 = vunpack.c.l.b16 %v30
  %v257 = vunpack.c.h.b16 %v30
  %v258 = vunpack.c.l.b16 %v31
  %v259 = vunpack.c.h.b16 %v31
  %v260 = vunpack.c.l.b16 %v32
  %v261 = vunpack.c.h.b16 %v32
  %v262 = vunpack.c.l.b16 %v33
  %v263 = vunpack.c.h.b16 %v33
  %v264 = vunpack.c.l.b16 %v34
  %v265 = vunpack.c.h.b16 %v34
  %v266 = vunpack.c.l.b16 %v35
  %v267 = vunpack.c.h.b16 %v35
  %v268 = vunpack.c.l.b16 %v36
  %v269 = vunpack.c.h.b16 %v36
  %v270 = vunpack.c.l.b16 %v37
  %v271 = vunpack.c.h.b16 %v37
  %v272 = vunpack.c.l.b16 %v38
  %v273 = vunpack.c.h.b16 %v38
  %v274 = vunpack.c.l.b16 %v39
  %v275 = vunpack.c.h.b16 %v39
  %v276 = vunpack.c.l.b16 %v40
  %v277 = vunpack.c.h.b16 %v40
  %v278 = vunpack.c.l.b16 %v41
  %v279 = vunpack.c.h.b16 %v41
  %v280 = vunpack.c.l.b16 %v42
  %v281 = vunpack.c.h.b16 %v42
  %v282 = vunpack.c.l.b16 %v43
  %v283 = vunpack.c.h.b16 %v43
  %v284 = vunpack.c.l.b16 %v44
  %v285 = vunpack.c.h.b16 %v44
  %v286 = vunpack.c.l.b16 %v45
  %v287 = vunpack.c.h.b16 %v45
  %v288 = vunpack.c.l.b16 %v46
  %v289 = vunpack.c.h.b16 %v46
  %v290 = vunpack.c.l.b16 %v47
  %v291 = vunpack.c.h.b16 %v47
  %v292 = vunpack.c.l.b16 %v48
  %v293 = vunpack.c.h.b16 %v48
  %v294 = vunpack.c.l.b16 %v49
  %v295 = vunpack.c.h.b16 %v49
  %v296 = vunpack.c.l.b16 %v50
  %v297 = vunpack.c.h.b16 %v50
  %v298 = vunpack.c.l.b16 %v51
  %v299 = vunpack.c.h.b16 %v51
  %v300 = vunpack.c.l.b16 %v52
  %v301 = vunpack.c.h.b16 %v52
  %v302 = vunpack.c.l.b16 %v53
  %v303 = vunpack.c.h.b16 %v53
  %v304 = vunpack.c.l.b16 %v54
  %v305 = vunpack.c.h.b16 %v54
  %v306 = vunpack.c.l.b16 %v55
  %v307 = vunpack.c.h.b16 %v55
  %v308 = vunpack.c.l.b16 %v56
  %v309 = vunpack.c.h.b16 %v56
  %v310 = vunpack.c.l.b16 %v57
  %v311 = vunpack.c.h.b16 %v57
  %v312 = vunpack.c.l.b16 %v58
  %v313 = vunpack.c.h.b16 %v58
  %v314 = vunpack.c.l.b16 %v59
  %v315 = vunpack.c.h.b16 %v59
  %v316 = vunpack.c.l.b16 %v60
  %v317 = vunpack.c.h.b16 %v60
  %v318 = vunpack.c.l.b16 %v61
  %v319 = vunpack.c.h.b16 %v61
  %v320 = vunpack.c.l.b16 %v62
  %v321 = vunpack.c.h.b16 %v62
  %v322 = vunpack.c.l.b16 %v63
  %v323 = vunpack.c.h.b16 %v63
  %v324 = vunpack.c.l.b16 %v64
  %v325 = vunpack.c.h.b16 %v64
  %v326 = vunpack.c.l.b16 %v65
  %v327 = vunpack.c.h.b16 %v65
  %v328 = vunpack.c.l.b16 %v66
  %v329 = vunpack.c.h.b16 %v66
  %v330 = vunpack.c.l.b16 %v67
  %v331 = vunpack.c.h.b16 %v67
  %v332 = vunpack.c.l.b16 %v68
  %v333 = vunpack.c.h.b16 %v68
  %v334 = vunpack.c.l.b16 %v69
  %v335 = vunpack.c.h.b16 %v69
  %v336 = vunpack.c.l.b16 %v70
  %v337 = vunpack.c.h.b16 %v70
  %v338 = vunpack.c.l.b16 %v71
  %v339 = vunpack.c.h.b16 %v71
  %v340 = vunpack.c.l.b16 %v72
  %v341 = vunpack.c.h.b16 %v72
  %v342 = vunpack.c.l.b16 %v73
  %v343 = vunpack.c.h.b16 %v73
  %v344 = vunpack.c.l.b16 %v74
  %v345 = vunpack.c.h.b16 %v74
  %v346 = vunpack.c.l.b16 %v75
  %v347 = vunpack.c.h.b16 %v75
  %v348 = vunpack.c.l.b16 %v76
  %v349 = vunpack.c.h.b16 %v76
  %v350 = vunpack.c.l.b16 %v77
  %v351 = vunpack.c.h.b16 %v77
  %v352 = vunpack.c.l.b16 %v78
  %v353 = vunpack.c.h.b16 %v78
  %v354 = vunpack.c.l.b16 %v79
  %v355 = vunpack.c.h.b16 %v79
  %v356 = vunpack.c.l.b16 %v80
  %v357 = vunpack.c.h.b16 %v80
  %v358 = vunpack.c.l.b16 %v81
  %v359 = vunpack.c.h.b16 %v81
  %v360 = vunpack.c.l.b16 %v82
  %v361 = vunpack.c.h.b16 %v82
  %v362 = vunpack.c.l.b16 %v83
  %v363 = vunpack.c.h.b16 %v83
  %v364 = vunpack.c.l.b16 %v84
  %v365 = vunpack.c.h.b16 %v84
  %v366 = vunpack.c.l.b16 %v85
  %v367 = vunpack.c.h.b16 %v85
  %v368 = vunpack.c.l.b16 %v86
  %v369 = vunpack.c.h.b16 %v86
  %v370 = vunpack.c.l.b16 %v87
  %v371 = vunpack.c.h.b16 %v87
  %v372 = vunpack.c.l.b16 %v88
  %v373 = vunpack.c.h.b16 %v88
  %v374 = vunpack.c.l.b16 %v89
  %v375 = vunpack.c.h.b16 %v89
  %v376 = vunpack.c.l.b16 %v90
  %v377 = vunpack.c.h.b16 %v90
  %v378 = vunpack.c.l.b16 %v91
  %v379 = vunpack.c.h.b16 %v91
  %v380 = vunpack.c.l.b16 %v92
  %v381 = vunpack.c.h.b16 %v92
  %v382 = vunpack.c.l.b16 %v93
  %v383 = vunpack.c.h.b16 %v93
  %v384 = vunpack.c.l.b16 %v94
  %v385 = vunpack.c.h.b16 %v94
  %v386 = vunpack.c.l.b16 %v95
  %v387 = vunpack.c.h.b16 %v95
  %v388 = vunpack.c.l.b16 %v96
  %v389 = vunpack.c.h.b16 %v96
  %v390 = vunpack.c.l.b16 %v97
  %v391 = vunpack.c.h.b16 %v97
  %v392 = vunpack.c.l.b16 %v98
  %v393 = vunpack.c.h.b16 %v98
  %v394 = vunpack.c.l.b16 %v99
  %v395 = vunpack.c.h.b16 %v99
  %v396 = vunpack.c.l.b16 %v100
  %v397 = vunpack.c.h.b16 %v100
  %v398 = vunpack.c.l.b16 %v101
  %v399 = vunpack.c.h.b16 %v101
  %v400 = vunpack.c.l.b16 %v102
  %v401 = vunpack.c.h.b16 %v102
  %v402 = vunpack.c.l.b16 %v103
  %v403 = vunpack.c.h.b16 %v103
  %v404 = vunpack.c.l.b16 %v104
  %v405 = vunpack.c.h.b16 %v104
  %v406 = vunpack.c.l.b16 %v105
  %v407 = vunpack.c.h.b16 %v105
  %v408 = vunpack.c.l.b16 %v106
  %v409 = vunpack.c.h.b16 %v106
  %v410 = vunpack.c.l.b16 %v107
  %v411 = vunpack.c.h.b16 %v107
  %v412 = vunpack.c.l.b16 %v108
  %v413 = vunpack.c.h.b16 %v108
  %v414 = vunpack.c.l.b16 %v109
  %v415 = vunpack.c.h.b16 %v109
  %v416 = vunpack.c.l.b16 %v110
  %v417 = vunpack.c.h.b16 %v110
  %v418 = vunpack.c.l.b16 %v111
  %v419 = vunpack.c.h.b16 %v111
  %v420 = vunpack.c.l.b16 %v112
  %v421 = vunpack.c.h.b16 %v112
  %v422 = vunpack.c.l.b16 %v113
  %v423 = vunpack.c.h.b16 %v113
  %v424 = vunpack.c.l.b16 %v114
  %v425 = vunpack.c.h.b16 %v114
  %v426 = vunpack.c.l.b16 %v115
  %v427 = vunpack.c.h.b16 %v115
  %v428 = vunpack.c.l.b16 %v116
  %v429 = vunpack.c.h.b16 %v116
  %v430 = vunpack.c.l.b16 %v117
  %v431 = vunpack.c.h.b16 %v117
  %v432 = vunpack.c.l.b16 %v118
  %v433 = vunpack.c.h.b16 %v118
  %v434 = vunpack.c.l.b16 %v119
  %v435 = vunpack.c.h.b16 %v119
  %v436 = vunpack.c.l.b16 %v120
  %v437 = vunpack.c.h.b16 %v120
  %v438 = vunpack.c.l.b16 %v121
  %v439 = vunpack.c.h.b16 %v121
  %v440 = vunpack.c.l.b16 %v122
  %v441 = vunpack.c.h.b16 %v122
  %v442 = vunpack.c.l.b16 %v123
  %v443 = vunpack.c.h.b16 %v123
  %v444 = vunpack.c.l.b16 %v124
  %v445 = vunpack.c.h.b16 %v124
  %v446 = vunpack.c.l.b16 %v125
  %v447 = vunpack.c.h.b16 %v125
  %v448 = vunpack.c.l.b16 %v126
  %v449 = vunpack.c.h.b16 %v126
  %v450 = vunpack.c.l.b16 %v127
  %v451 = vunpack.c.h.b16 %v127
  %v452 = vunpack.c.l.b16 %v128
  %v453 = vunpack.c.h.b16 %v128
  %v454 = vunpack.c.l.b16 %v129
  %v455 = vunpack.c.h.b16 %v129
  %v456 = vunpack.c.l.b16 %v130
  %v457 = vunpack.c.h.b16 %v130
  %v458 = vunpack.c.l.b16 %v131
  %v459 = vunpack.c.h.b16 %v131
  %v460 = vunpack.c.l.b16 %v132
  %v461 = vunpack.c.h.b16 %v132
  %v462 = vunpack.c.l.b16 %v133
  %v463 = vunpack.c.h.b16 %v133
  %v464 = vpack.c.b16 %v260, %v248
  %v465 = vpack.c.b16 %v261, %v249
  %v466 = vpack.c.b16 %v262, %v250
  %v467 = vpack.c.b16 %v263, %v251
  %v468 = vpack.c.b16 %v264, %v252
  %v469 = vpack.c.b16 %v265, %v253
  %v470 = vpack.c.b16 %v266, %v254
  %v471 = vpack.c.b16 %v267, %v255
  %v472 = vpack.c.b16 %v268, %v256
  %v473 = vpack.c.b16 %v269, %v257
  %v474 = vpack.c.b16 %v270, %v258
  %v475 = vpack.c.b16 %v271, %v259
  %v476 = vpack.c.b16 %v284, %v272
  %v477 = vpack.c.b16 %v285, %v273
  %v478 = vpack.c.b16 %v286, %v274
  %v479 = vpack.c.b16 %v287, %v275
  %v480 = vpack.c.b16 %v288, %v276
  %v481 = vpack.c.b16 %v289, %v277
  %v482 = vpack.c.b16 %v290, %v278
  %v483 = vpack.c.b16 %v291, %v279
  %v484 = vpack.c.b16 %v292, %v280
  %v485 = vpack.c.b16 %v293, %v281
  %v486 = vpack.c.b16 %v294, %v282
  %v487 = vpack.c.b16 %v295, %v283
  %v488 = vpack.c.b16 %v308, %v296
  %v489 = vpack.c.b16 %v309, %v297
  %v490 = vpack.c.b16 %v310, %v298
  %v491 = vpack.c.b16 %v311, %v299
  %v492 = vpack.c.b16 %v312, %v300
  %v493 = vpack.c.b16 %v313, %v301
  %v494 = vpack.c.b16 %v314, %v302
  %v495 = vpack.c.b16 %v315, %v303
  %v496 = vpack.c.b16 %v316, %v304
  %v497 = vpack.c.b16 %v317, %v305
  %v498 = vpack.c.b16 %v318, %v306
  %v499 = vpack.c.b16 %v319, %v307
  %v500 = vpack.c.b16 %v332, %v320
  %v501 = vpack.c.b16 %v333, %v321
  %v502 = vpack.c.b16 %v334, %v322
  %v503 = vpack.c.b16 %v335, %v323
  %v504 = vpack.c.b16 %v336, %v324
  %v505 = vpack.c.b16 %v337, %v325
  %v506 = vpack.c.b16 %v338, %v326
  %v507 = vpack.c.b16 %v339, %v327
  %v508 = vpack.c.b16 %v340, %v328
  %v509 = vpack.c.b16 %v341, %v329
  %v510 = vpack.c.b16 %v342, %v330
  %v511 = vpack.c.b16 %v343, %v331
  %v512 = vpack.c.b16 %v356, %v344
  %v513 = vpack.c.b16 %v357, %v345
  %v514 = vpack.c.b16 %v358, %v346
  %v515 = vpack.c.b16 %v359, %v347
  %v516 = vpack.c.b16 %v360, %v348
  %v517 = vpack.c.b16 %v361, %v349
  %v518 = vpack.c.b16 %v362, %v350
  %v519 = vpack.c.b16 %v363, %v351
  %v520 = vpack.c.b16 %v364, %v352
  %v521 = vpack.c.b16 %v365, %v353
  %v522 = vpack.c.b16 %v366, %v354
  %v523 = vpack.c.b16 %v367, %v355
  %v524 = vpack.c.b16 %v380, %v368
  %v525 = vpack.c.b16 %v381, %v369
  %v526 = vpack.c.b16 %v382, %v370
  %v527 = vpack.c.b16 %v383, %v371
  %v528 = vpack.c.b16 %v384, %v372
  %v529 = vpack.c.b16 %v385, %v373
  %v530 = vpack.c.b16 %v386, %v374
  %v531 = vpack.c.b16 %v387, %v375
  %v532 = vpack.c.b16 %v388, %v376
  %v533 = vpack.c.b16 %v389, %v377
  %v534 = vpack.c.b16 %v390, %v378
  %v535 = vpack.c.b16 %v391, %v379
  %v536 = vpack.c.b16 %v404, %v392
  %v537 = vpack.c.b16 %v405, %v393
  %v538 = vpack.c.b16 %v406, %v394
  %v539 = vpack.c.b16 %v407, %v395
  %v540 = vpack.c.b16 %v408, %v396
  %v541 = vpack.c.b16 %v409, %v397
  %v542 = vpack.c.b16 %v410, %v398
  %v543 = vpack.c.b16 %v411, %v399
  %v544 = vpack.c.b16 %v412, %v400
  %v545 = vpack.c.b16 %v413, %v401
  %v546 = vpack.c.b16 %v414, %v402
  %v547 = vpack.c.b16 %v415, %v403
  %v548 = vpack.c.b16 %v428, %v416
  %v549 = vpack.c.b16 %v429, %v417
  %v550 = vpack.c.b16 %v430, %v418
  %v551 = vpack.c.b16 %v431, %v419
  %v552 = vpack.c.b16 %v432, %v420
  %v553 = vpack.c.b16 %v433, %v421
  %v554 = vpack.c.b16 %v434, %v422
  %v555 = vpack.c.b16 %v435, %v423
  %v556 = vpack.c.b16 %v436, %v424
  %v557 = vpack.c.b16 %v437, %v425
  %v558 = vpack.c.b16 %v438, %v426
  %v559 = vpack.c.b16 %v439, %v427
  %v560 = vpack.c.b16 %v452, %v440
  %v561 = vpack.c.b16 %v453, %v441
  %v562 = vpack.c.b16 %v454, %v442
  %v563 = vpack.c.b16 %v455, %v443
  %v564 = vpack.c.b16 %v456, %v444
  %v565 = vpack.c.b16 %v457, %v445
  %v566 = vpack.c.b16 %v458, %v446
  %v567 = vpack.c.b16 %v459, %v447
  %v568 = vpack.c.b16 %v460, %v448
  %v569 = vpack.c.b16 %v461, %v449
  %v570 = vpack.c.b16 %v462, %v450
  %v571 = vpack.c.b16 %v463, %v451
  %vm680 = vcmask 130048
  %v682 = vsel %vm680, %v138, 0
  %684 = vmatpush.bf16.msra.mxu0 %v548
  %685 = vmatpush.bf16.msra.mxu0 %v536
  %686 = vmatpush.bf16.msra.mxu0 %v524
  %687 = vmatpush.bf16.msra.mxu0 %v512
  %688 = vmatpush.bf16.msra.mxu0 %v500
  %689 = vmatpush.bf16.msra.mxu0 %v488
  %690 = vmatpush.bf16.msra.mxu0 %v476
  %691 = vmatpush.bf16.msra.mxu0 %v464
  %692 = vmatmul.bf16.gmra.mxu0 %v137
  %v693 = vpop.f32.mrf.mxu0
  %v694 = vadd.f32 0.0, %v693
  %v695 = vpop.f32.mrf.mxu0
  %696 = vdwg.mxu0
  %697 = vmatpush.bf16.msra.mxu0 0
  %698 = vmatpush.bf16.msra.mxu0 0
  %699 = vmatpush.bf16.msra.mxu0 0
  %700 = vmatpush.bf16.msra.mxu0 0
  %701 = vmatpush.bf16.msra.mxu0 0
  %702 = vmatpush.bf16.msra.mxu0 0
  %703 = vmatpush.bf16.msra.mxu0 0
  %704 = vmatpush.bf16.msra.mxu0 %v560
  %705 = vmatmul.bf16.gmra.mxu0 %v682
  %v706 = vpop.f32.mrf.mxu0
  %v707 = vadd.f32 %v694, %v706
  %v708 = vpop.f32.mrf.mxu0
  %709 = vdwg.mxu0
  %710 = vmatpush.bf16.msra.mxu0 %v549
  %711 = vmatpush.bf16.msra.mxu0 %v537
  %712 = vmatpush.bf16.msra.mxu0 %v525
  %713 = vmatpush.bf16.msra.mxu0 %v513
  %714 = vmatpush.bf16.msra.mxu0 %v501
  %715 = vmatpush.bf16.msra.mxu0 %v489
  %716 = vmatpush.bf16.msra.mxu0 %v477
  %717 = vmatpush.bf16.msra.mxu0 %v465
  %718 = vmatmul.bf16.gmra.mxu0 %v137
  %v719 = vpop.f32.mrf.mxu0
  %v720 = vadd.f32 0.0, %v719
  %v721 = vpop.f32.mrf.mxu0
  %722 = vdwg.mxu0
  %723 = vmatpush.bf16.msra.mxu0 0
  %724 = vmatpush.bf16.msra.mxu0 0
  %725 = vmatpush.bf16.msra.mxu0 0
  %726 = vmatpush.bf16.msra.mxu0 0
  %727 = vmatpush.bf16.msra.mxu0 0
  %728 = vmatpush.bf16.msra.mxu0 0
  %729 = vmatpush.bf16.msra.mxu0 0
  %730 = vmatpush.bf16.msra.mxu0 %v561
  %731 = vmatmul.bf16.gmra.mxu0 %v682
  %v732 = vpop.f32.mrf.mxu0
  %v733 = vadd.f32 %v720, %v732
  %v734 = vpop.f32.mrf.mxu0
  %735 = vdwg.mxu0
  %736 = vmatpush.bf16.msra.mxu0 %v550
  %737 = vmatpush.bf16.msra.mxu0 %v538
  %738 = vmatpush.bf16.msra.mxu0 %v526
  %739 = vmatpush.bf16.msra.mxu0 %v514
  %740 = vmatpush.bf16.msra.mxu0 %v502
  %741 = vmatpush.bf16.msra.mxu0 %v490
  %742 = vmatpush.bf16.msra.mxu0 %v478
  %743 = vmatpush.bf16.msra.mxu0 %v466
  %744 = vmatmul.bf16.gmra.mxu0 %v137
  %v745 = vpop.f32.mrf.mxu0
  %v746 = vadd.f32 0.0, %v745
  %v747 = vpop.f32.mrf.mxu0
  %748 = vdwg.mxu0
  %749 = vmatpush.bf16.msra.mxu0 0
  %750 = vmatpush.bf16.msra.mxu0 0
  %751 = vmatpush.bf16.msra.mxu0 0
  %752 = vmatpush.bf16.msra.mxu0 0
  %753 = vmatpush.bf16.msra.mxu0 0
  %754 = vmatpush.bf16.msra.mxu0 0
  %755 = vmatpush.bf16.msra.mxu0 0
  %756 = vmatpush.bf16.msra.mxu0 %v562
  %757 = vmatmul.bf16.gmra.mxu0 %v682
  %v758 = vpop.f32.mrf.mxu0
  %v759 = vadd.f32 %v746, %v758
  %v760 = vpop.f32.mrf.mxu0
  %761 = vdwg.mxu0
  %762 = vmatpush.bf16.msra.mxu0 %v551
  %763 = vmatpush.bf16.msra.mxu0 %v539
  %764 = vmatpush.bf16.msra.mxu0 %v527
  %765 = vmatpush.bf16.msra.mxu0 %v515
  %766 = vmatpush.bf16.msra.mxu0 %v503
  %767 = vmatpush.bf16.msra.mxu0 %v491
  %768 = vmatpush.bf16.msra.mxu0 %v479
  %769 = vmatpush.bf16.msra.mxu0 %v467
  %770 = vmatmul.bf16.gmra.mxu0 %v137
  %v771 = vpop.f32.mrf.mxu0
  %v772 = vadd.f32 0.0, %v771
  %v773 = vpop.f32.mrf.mxu0
  %774 = vdwg.mxu0
  %775 = vmatpush.bf16.msra.mxu0 0
  %776 = vmatpush.bf16.msra.mxu0 0
  %777 = vmatpush.bf16.msra.mxu0 0
  %778 = vmatpush.bf16.msra.mxu0 0
  %779 = vmatpush.bf16.msra.mxu0 0
  %780 = vmatpush.bf16.msra.mxu0 0
  %781 = vmatpush.bf16.msra.mxu0 0
  %782 = vmatpush.bf16.msra.mxu0 %v563
  %783 = vmatmul.bf16.gmra.mxu0 %v682
  %v784 = vpop.f32.mrf.mxu0
  %v785 = vadd.f32 %v772, %v784
  %v786 = vpop.f32.mrf.mxu0
  %787 = vdwg.mxu0
  %788 = vmatpush.bf16.msra.mxu0 %v552
  %789 = vmatpush.bf16.msra.mxu0 %v540
  %790 = vmatpush.bf16.msra.mxu0 %v528
  %791 = vmatpush.bf16.msra.mxu0 %v516
  %792 = vmatpush.bf16.msra.mxu0 %v504
  %793 = vmatpush.bf16.msra.mxu0 %v492
  %794 = vmatpush.bf16.msra.mxu0 %v480
  %795 = vmatpush.bf16.msra.mxu0 %v468
  %796 = vmatmul.bf16.gmra.mxu0 %v137
  %v797 = vpop.f32.mrf.mxu0
  %v798 = vadd.f32 0.0, %v797
  %v799 = vpop.f32.mrf.mxu0
  %800 = vdwg.mxu0
  %801 = vmatpush.bf16.msra.mxu0 0
  %802 = vmatpush.bf16.msra.mxu0 0
  %803 = vmatpush.bf16.msra.mxu0 0
  %804 = vmatpush.bf16.msra.mxu0 0
  %805 = vmatpush.bf16.msra.mxu0 0
  %806 = vmatpush.bf16.msra.mxu0 0
  %807 = vmatpush.bf16.msra.mxu0 0
  %808 = vmatpush.bf16.msra.mxu0 %v564
  %809 = vmatmul.bf16.gmra.mxu0 %v682
  %v810 = vpop.f32.mrf.mxu0
  %v811 = vadd.f32 %v798, %v810
  %v812 = vpop.f32.mrf.mxu0
  %813 = vdwg.mxu0
  %814 = vmatpush.bf16.msra.mxu0 %v553
  %815 = vmatpush.bf16.msra.mxu0 %v541
  %816 = vmatpush.bf16.msra.mxu0 %v529
  %817 = vmatpush.bf16.msra.mxu0 %v517
  %818 = vmatpush.bf16.msra.mxu0 %v505
  %819 = vmatpush.bf16.msra.mxu0 %v493
  %820 = vmatpush.bf16.msra.mxu0 %v481
  %821 = vmatpush.bf16.msra.mxu0 %v469
  %822 = vmatmul.bf16.gmra.mxu0 %v137
  %v823 = vpop.f32.mrf.mxu0
  %v824 = vadd.f32 0.0, %v823
  %v825 = vpop.f32.mrf.mxu0
  %826 = vdwg.mxu0
  %827 = vmatpush.bf16.msra.mxu0 0
  %828 = vmatpush.bf16.msra.mxu0 0
  %829 = vmatpush.bf16.msra.mxu0 0
  %830 = vmatpush.bf16.msra.mxu0 0
  %831 = vmatpush.bf16.msra.mxu0 0
  %832 = vmatpush.bf16.msra.mxu0 0
  %833 = vmatpush.bf16.msra.mxu0 0
  %834 = vmatpush.bf16.msra.mxu0 %v565
  %835 = vmatmul.bf16.gmra.mxu0 %v682
  %v836 = vpop.f32.mrf.mxu0
  %v837 = vadd.f32 %v824, %v836
  %v838 = vpop.f32.mrf.mxu0
  %839 = vdwg.mxu0
  %840 = vmatpush.bf16.msra.mxu0 %v554
  %841 = vmatpush.bf16.msra.mxu0 %v542
  %842 = vmatpush.bf16.msra.mxu0 %v530
  %843 = vmatpush.bf16.msra.mxu0 %v518
  %844 = vmatpush.bf16.msra.mxu0 %v506
  %845 = vmatpush.bf16.msra.mxu0 %v494
  %846 = vmatpush.bf16.msra.mxu0 %v482
  %847 = vmatpush.bf16.msra.mxu0 %v470
  %848 = vmatmul.bf16.gmra.mxu0 %v137
  %v849 = vpop.f32.mrf.mxu0
  %v850 = vadd.f32 0.0, %v849
  %v851 = vpop.f32.mrf.mxu0
  %852 = vdwg.mxu0
  %853 = vmatpush.bf16.msra.mxu0 0
  %854 = vmatpush.bf16.msra.mxu0 0
  %855 = vmatpush.bf16.msra.mxu0 0
  %856 = vmatpush.bf16.msra.mxu0 0
  %857 = vmatpush.bf16.msra.mxu0 0
  %858 = vmatpush.bf16.msra.mxu0 0
  %859 = vmatpush.bf16.msra.mxu0 0
  %860 = vmatpush.bf16.msra.mxu0 %v566
  %861 = vmatmul.bf16.gmra.mxu0 %v682
  %v862 = vpop.f32.mrf.mxu0
  %v863 = vadd.f32 %v850, %v862
  %v864 = vpop.f32.mrf.mxu0
  %865 = vdwg.mxu0
  %866 = vmatpush.bf16.msra.mxu0 %v555
  %867 = vmatpush.bf16.msra.mxu0 %v543
  %868 = vmatpush.bf16.msra.mxu0 %v531
  %869 = vmatpush.bf16.msra.mxu0 %v519
  %870 = vmatpush.bf16.msra.mxu0 %v507
  %871 = vmatpush.bf16.msra.mxu0 %v495
  %872 = vmatpush.bf16.msra.mxu0 %v483
  %873 = vmatpush.bf16.msra.mxu0 %v471
  %874 = vmatmul.bf16.gmra.mxu0 %v137
  %v875 = vpop.f32.mrf.mxu0
  %v876 = vadd.f32 0.0, %v875
  %v877 = vpop.f32.mrf.mxu0
  %878 = vdwg.mxu0
  %879 = vmatpush.bf16.msra.mxu0 0
  %880 = vmatpush.bf16.msra.mxu0 0
  %881 = vmatpush.bf16.msra.mxu0 0
  %882 = vmatpush.bf16.msra.mxu0 0
  %883 = vmatpush.bf16.msra.mxu0 0
  %884 = vmatpush.bf16.msra.mxu0 0
  %885 = vmatpush.bf16.msra.mxu0 0
  %886 = vmatpush.bf16.msra.mxu0 %v567
  %887 = vmatmul.bf16.gmra.mxu0 %v682
  %v888 = vpop.f32.mrf.mxu0
  %v889 = vadd.f32 %v876, %v888
  %v890 = vpop.f32.mrf.mxu0
  %891 = vdwg.mxu0
  %892 = vmatpush.bf16.msra.mxu0 %v556
  %893 = vmatpush.bf16.msra.mxu0 %v544
  %894 = vmatpush.bf16.msra.mxu0 %v532
  %895 = vmatpush.bf16.msra.mxu0 %v520
  %896 = vmatpush.bf16.msra.mxu0 %v508
  %897 = vmatpush.bf16.msra.mxu0 %v496
  %898 = vmatpush.bf16.msra.mxu0 %v484
  %899 = vmatpush.bf16.msra.mxu0 %v472
  %900 = vmatmul.bf16.gmra.mxu0 %v137
  %v901 = vpop.f32.mrf.mxu0
  %v902 = vadd.f32 0.0, %v901
  %v903 = vpop.f32.mrf.mxu0
  %904 = vdwg.mxu0
  %905 = vmatpush.bf16.msra.mxu0 0
  %906 = vmatpush.bf16.msra.mxu0 0
  %907 = vmatpush.bf16.msra.mxu0 0
  %908 = vmatpush.bf16.msra.mxu0 0
  %909 = vmatpush.bf16.msra.mxu0 0
  %910 = vmatpush.bf16.msra.mxu0 0
  %911 = vmatpush.bf16.msra.mxu0 0
  %912 = vmatpush.bf16.msra.mxu0 %v568
  %913 = vmatmul.bf16.gmra.mxu0 %v682
  %v914 = vpop.f32.mrf.mxu0
  %v915 = vadd.f32 %v902, %v914
  %v916 = vpop.f32.mrf.mxu0
  %917 = vdwg.mxu0
  %918 = vmatpush.bf16.msra.mxu0 %v557
  %919 = vmatpush.bf16.msra.mxu0 %v545
  %920 = vmatpush.bf16.msra.mxu0 %v533
  %921 = vmatpush.bf16.msra.mxu0 %v521
  %922 = vmatpush.bf16.msra.mxu0 %v509
  %923 = vmatpush.bf16.msra.mxu0 %v497
  %924 = vmatpush.bf16.msra.mxu0 %v485
  %925 = vmatpush.bf16.msra.mxu0 %v473
  %926 = vmatmul.bf16.gmra.mxu0 %v137
  %v927 = vpop.f32.mrf.mxu0
  %v928 = vadd.f32 0.0, %v927
  %v929 = vpop.f32.mrf.mxu0
  %930 = vdwg.mxu0
  %931 = vmatpush.bf16.msra.mxu0 0
  %932 = vmatpush.bf16.msra.mxu0 0
  %933 = vmatpush.bf16.msra.mxu0 0
  %934 = vmatpush.bf16.msra.mxu0 0
  %935 = vmatpush.bf16.msra.mxu0 0
  %936 = vmatpush.bf16.msra.mxu0 0
  %937 = vmatpush.bf16.msra.mxu0 0
  %938 = vmatpush.bf16.msra.mxu0 %v569
  %939 = vmatmul.bf16.gmra.mxu0 %v682
  %v940 = vpop.f32.mrf.mxu0
  %v941 = vadd.f32 %v928, %v940
  %v942 = vpop.f32.mrf.mxu0
  %943 = vdwg.mxu0
  %944 = vmatpush.bf16.msra.mxu0 %v558
  %945 = vmatpush.bf16.msra.mxu0 %v546
  %946 = vmatpush.bf16.msra.mxu0 %v534
  %947 = vmatpush.bf16.msra.mxu0 %v522
  %948 = vmatpush.bf16.msra.mxu0 %v510
  %949 = vmatpush.bf16.msra.mxu0 %v498
  %950 = vmatpush.bf16.msra.mxu0 %v486
  %951 = vmatpush.bf16.msra.mxu0 %v474
  %952 = vmatmul.bf16.gmra.mxu0 %v137
  %v953 = vpop.f32.mrf.mxu0
  %v954 = vadd.f32 0.0, %v953
  %v955 = vpop.f32.mrf.mxu0
  %956 = vdwg.mxu0
  %957 = vmatpush.bf16.msra.mxu0 0
  %958 = vmatpush.bf16.msra.mxu0 0
  %959 = vmatpush.bf16.msra.mxu0 0
  %960 = vmatpush.bf16.msra.mxu0 0
  %961 = vmatpush.bf16.msra.mxu0 0
  %962 = vmatpush.bf16.msra.mxu0 0
  %963 = vmatpush.bf16.msra.mxu0 0
  %964 = vmatpush.bf16.msra.mxu0 %v570
  %965 = vmatmul.bf16.gmra.mxu0 %v682
  %v966 = vpop.f32.mrf.mxu0
  %v967 = vadd.f32 %v954, %v966
  %v968 = vpop.f32.mrf.mxu0
  %969 = vdwg.mxu0
  %970 = vmatpush.bf16.msra.mxu0 %v559
  %971 = vmatpush.bf16.msra.mxu0 %v547
  %972 = vmatpush.bf16.msra.mxu0 %v535
  %973 = vmatpush.bf16.msra.mxu0 %v523
  %974 = vmatpush.bf16.msra.mxu0 %v511
  %975 = vmatpush.bf16.msra.mxu0 %v499
  %976 = vmatpush.bf16.msra.mxu0 %v487
  %977 = vmatpush.bf16.msra.mxu0 %v475
  %978 = vmatmul.bf16.gmra.mxu0 %v137
  %v979 = vpop.f32.mrf.mxu0
  %v980 = vadd.f32 0.0, %v979
  %v981 = vpop.f32.mrf.mxu0
  %982 = vdwg.mxu0
  %983 = vmatpush.bf16.msra.mxu0 0
  %984 = vmatpush.bf16.msra.mxu0 0
  %985 = vmatpush.bf16.msra.mxu0 0
  %986 = vmatpush.bf16.msra.mxu0 0
  %987 = vmatpush.bf16.msra.mxu0 0
  %988 = vmatpush.bf16.msra.mxu0 0
  %989 = vmatpush.bf16.msra.mxu0 0
  %990 = vmatpush.bf16.msra.mxu0 %v571
  %991 = vmatmul.bf16.gmra.mxu0 %v682
  %v992 = vpop.f32.mrf.mxu0
  %v993 = vadd.f32 %v980, %v992
  %v994 = vpop.f32.mrf.mxu0
  %995 = vdwg.mxu0
  %v996 = vld [vmem:[#allocation3] sm:$0xff]
  %v997 = vadd.f32 %v707, %v733
  %v998 = vadd.f32 %v997, %v759
  %v999 = vadd.f32 %v998, %v785
  %v1000 = vadd.f32 %v999, %v811
  %v1001 = vadd.f32 %v1000, %v837
  %v1002 = vadd.f32 %v1001, %v863
  %v1003 = vadd.f32 %v1002, %v889
  %v1004 = vadd.f32 %v1003, %v915
  %v1005 = vadd.f32 %v1004, %v941
  %v1006 = vadd.f32 %v1005, %v967
  %v1007 = vadd.f32 %v1006, %v993
  %1008 = vadd.xlane.f32.xlu0 %v1007
  %v1009 = vpop.xlane.xlu0 %1008
  %v1010 = vadd.f32 %v996, %v1009
  %vm1011 = vcmask 7168
  %1012 = vst.msk [vmem:[#allocation3] sm:$0xff] %vm1011, %v1010
  %v1013 = vld [vmem:[#allocation4] sm:$0xff]
  %v1014 = vmul.f32 %v707, %v707
  %v1015 = vmul.f32 %v733, %v733
  %v1016 = vmul.f32 %v759, %v759
  %v1017 = vmul.f32 %v785, %v785
  %v1018 = vmul.f32 %v811, %v811
  %v1019 = vmul.f32 %v837, %v837
  %v1020 = vmul.f32 %v863, %v863
  %v1021 = vmul.f32 %v889, %v889
  %v1022 = vmul.f32 %v915, %v915
  %v1023 = vmul.f32 %v941, %v941
  %v1024 = vmul.f32 %v967, %v967
  %v1025 = vmul.f32 %v993, %v993
  %v1026 = vadd.f32 %v1014, %v1015
  %v1027 = vadd.f32 %v1026, %v1016
  %v1028 = vadd.f32 %v1027, %v1017
  %v1029 = vadd.f32 %v1028, %v1018
  %v1030 = vadd.f32 %v1029, %v1019
  %v1031 = vadd.f32 %v1030, %v1020
  %v1032 = vadd.f32 %v1031, %v1021
  %v1033 = vadd.f32 %v1032, %v1022
  %v1034 = vadd.f32 %v1033, %v1023
  %v1035 = vadd.f32 %v1034, %v1024
  %v1036 = vadd.f32 %v1035, %v1025
  %1037 = vadd.xlane.f32.xlu0 %v1036
  %v1038 = vpop.xlane.xlu0 %1037
  %v1039 = vadd.f32 %v1013, %v1038
  %1040 = vst.msk [vmem:[#allocation4] sm:$0xff] %vm1011, %v1039
  %s1041 = smul.u32 0, 12
  %s1042 = smul.addr %s1041, 8
  %s1043 = scalar_lea.vmem [#allocation2], %s1042
  %1044 = vst [vmem:[%s1043] sm:$0xff] %v707
  %1045 = vst [vmem:[%s1043 + $0x8] sm:$0xff] %v733
  %1046 = vst [vmem:[%s1043 + $0x10] sm:$0xff] %v759
  %1047 = vst [vmem:[%s1043 + $0x18] sm:$0xff] %v785
  %1048 = vst [vmem:[%s1043 + $0x20] sm:$0xff] %v811
  %1049 = vst [vmem:[%s1043 + $0x28] sm:$0xff] %v837
  %1050 = vst [vmem:[%s1043 + $0x30] sm:$0xff] %v863
  %1051 = vst [vmem:[%s1043 + $0x38] sm:$0xff] %v889
  %1052 = vst [vmem:[%s1043 + $0x40] sm:$0xff] %v915
  %1053 = vst [vmem:[%s1043 + $0x48] sm:$0xff] %v941
  %1054 = vst [vmem:[%s1043 + $0x50] sm:$0xff] %v967
  %1055 = vst [vmem:[%s1043 + $0x58] sm:$0xff] %v993
  // Predicated region
  $region22: #{core_wrapper_forward.3} parent=0 // pred_check
    %p1056 = pneg %p18
  $region23: #{core_wrapper_forward.3} parent=0 // pred_check_branch
    %1058 = sbr.rel (%p1056) target = $region25
  $region24: #{core_wrapper_forward.3} parent=0 // pred_region
    %v1059 = vld [vmem:[#allocation3] sm:$0xff]
    %v1060 = vmul.f32 %v1059, 0.00069444446
    %v1061 = vld [vmem:[#allocation4] sm:$0xff]
    %v1062 = vmul.f32 %v1061, 0.00069444446
    %v1063 = vmul.f32 %v1060, %v1060
    %v1064 = vsub.f32 %v1062, %v1063
    %v1065 = vmax.f32 %v1064, 0.0
    %v1066 = vadd.f32 %v1065, 1e-05
    %v1067 = vrsqrt.pop %v1066
    %v1068 = vmul.f32 %v1067, %v1066
    %v1069 = vmul.f32 %v1068, %v1067
    %v1070 = vmul.f32 0.5, %v1069
    %v1071 = vsub.f32 1.5, %v1070
    %v1072 = vmul.f32 %v1067, %v1071
    %vm1073 = vweird.f32 %v1066
    %vm1074 = vweird.f32 %v1067
    %vm1075 = vmor %vm1073, %vm1074
    %v1076 = vsel %vm1075, %v1067, %v1072
    %v1077 = vld [vmem:[%s2] sm:$0xff]
    %v1078 = vmul.f32 %v1077, %v1076
    %v1079 = vld [vmem:[%s3] sm:$0xff]
    %v1080 = vmul.f32 %v1060, %v1078
    %v1081 = vsub.f32 %v1079, %v1080
    %v1082 = vld [vmem:[#allocation2] sm:$0xff]
    %v1083 = vld [vmem:[#allocation2 + $0x8] sm:$0xff]
    %v1084 = vld [vmem:[#allocation2 + $0x10] sm:$0xff]
    %v1085 = vld [vmem:[#allocation2 + $0x18] sm:$0xff]
    %v1086 = vld [vmem:[#allocation2 + $0x20] sm:$0xff]
    %v1087 = vld [vmem:[#allocation2 + $0x28] sm:$0xff]
    %v1088 = vld [vmem:[#allocation2 + $0x30] sm:$0xff]
    %v1089 = vld [vmem:[#allocation2 + $0x38] sm:$0xff]
    %v1090 = vld [vmem:[#allocation2 + $0x40] sm:$0xff]
    %v1091 = vld [vmem:[#allocation2 + $0x48] sm:$0xff]
    %v1092 = vld [vmem:[#allocation2 + $0x50] sm:$0xff]
    %v1093 = vld [vmem:[#allocation2 + $0x58] sm:$0xff]
    %1095 = vset.pattern.permute.xlu0 0
    %1096 = vperm.xlu0 %1095, %v1078
    %v1097 = vpop.permute.xlu0 %1096
    %v1099 = vmul.f32 %v1082, %v1097
    %v1100 = vmul.f32 %v1083, %v1097
    %v1101 = vmul.f32 %v1084, %v1097
    %v1102 = vmul.f32 %v1085, %v1097
    %v1103 = vmul.f32 %v1086, %v1097
    %v1104 = vmul.f32 %v1087, %v1097
    %v1105 = vmul.f32 %v1088, %v1097
    %v1106 = vmul.f32 %v1089, %v1097
    %v1107 = vmul.f32 %v1090, %v1097
    %v1108 = vmul.f32 %v1091, %v1097
    %v1109 = vmul.f32 %v1092, %v1097
    %v1110 = vmul.f32 %v1093, %v1097
    %1112 = vset.pattern.permute.xlu0 0
    %1113 = vperm.xlu0 %1112, %v1081
    %v1114 = vpop.permute.xlu0 %1113
    %v1116 = vadd.f32 %v1099, %v1114
    %v1117 = vadd.f32 %v1100, %v1114
    %v1118 = vadd.f32 %v1101, %v1114
    %v1119 = vadd.f32 %v1102, %v1114
    %v1120 = vadd.f32 %v1103, %v1114
    %v1121 = vadd.f32 %v1104, %v1114
    %v1122 = vadd.f32 %v1105, %v1114
    %v1123 = vadd.f32 %v1106, %v1114
    %v1124 = vadd.f32 %v1107, %v1114
    %v1125 = vadd.f32 %v1108, %v1114
    %v1126 = vadd.f32 %v1109, %v1114
    %v1127 = vadd.f32 %v1110, %v1114
    %vm1128 = vcmp.gt.f32.partialorder %v1116, 0.0
    %vm1129 = vcmp.gt.f32.partialorder %v1117, 0.0
    %vm1130 = vcmp.gt.f32.partialorder %v1118, 0.0
    %vm1131 = vcmp.gt.f32.partialorder %v1119, 0.0
    %vm1132 = vcmp.gt.f32.partialorder %v1120, 0.0
    %vm1133 = vcmp.gt.f32.partialorder %v1121, 0.0
    %vm1134 = vcmp.gt.f32.partialorder %v1122, 0.0
    %vm1135 = vcmp.gt.f32.partialorder %v1123, 0.0
    %vm1136 = vcmp.gt.f32.partialorder %v1124, 0.0
    %vm1137 = vcmp.gt.f32.partialorder %v1125, 0.0
    %vm1138 = vcmp.gt.f32.partialorder %v1126, 0.0
    %vm1139 = vcmp.gt.f32.partialorder %v1127, 0.0
    %v1140 = vmul.f32 %v1116, 1.442695
    %v1141 = vpow.pop %v1140
    %v1142 = vmul.f32 %v1117, 1.442695
    %v1143 = vpow.pop %v1142
    %v1144 = vmul.f32 %v1118, 1.442695
    %v1145 = vpow.pop %v1144
    %v1146 = vmul.f32 %v1119, 1.442695
    %v1147 = vpow.pop %v1146
    %v1148 = vmul.f32 %v1120, 1.442695
    %v1149 = vpow.pop %v1148
    %v1150 = vmul.f32 %v1121, 1.442695
    %v1151 = vpow.pop %v1150
    %v1152 = vmul.f32 %v1122, 1.442695
    %v1153 = vpow.pop %v1152
    %v1154 = vmul.f32 %v1123, 1.442695
    %v1155 = vpow.pop %v1154
    %v1156 = vmul.f32 %v1124, 1.442695
    %v1157 = vpow.pop %v1156
    %v1158 = vmul.f32 %v1125, 1.442695
    %v1159 = vpow.pop %v1158
    %v1160 = vmul.f32 %v1126, 1.442695
    %v1161 = vpow.pop %v1160
    %v1162 = vmul.f32 %v1127, 1.442695
    %v1163 = vpow.pop %v1162
    %v1164 = vsub.f32 %v1141, 1.0
    %v1165 = vsub.f32 %v1143, 1.0
    %v1166 = vsub.f32 %v1145, 1.0
    %v1167 = vsub.f32 %v1147, 1.0
    %v1168 = vsub.f32 %v1149, 1.0
    %v1169 = vsub.f32 %v1151, 1.0
    %v1170 = vsub.f32 %v1153, 1.0
    %v1171 = vsub.f32 %v1155, 1.0
    %v1172 = vsub.f32 %v1157, 1.0
    %v1173 = vsub.f32 %v1159, 1.0
    %v1174 = vsub.f32 %v1161, 1.0
    %v1175 = vsub.f32 %v1163, 1.0
    %v1176 = vsel %vm1128, %v1116, %v1164
    %v1177 = vsel %vm1129, %v1117, %v1165
    %v1178 = vsel %vm1130, %v1118, %v1166
    %v1179 = vsel %vm1131, %v1119, %v1167
    %v1180 = vsel %vm1132, %v1120, %v1168
    %v1181 = vsel %vm1133, %v1121, %v1169
    %v1182 = vsel %vm1134, %v1122, %v1170
    %v1183 = vsel %vm1135, %v1123, %v1171
    %v1184 = vsel %vm1136, %v1124, %v1172
    %v1185 = vsel %vm1137, %v1125, %v1173
    %v1186 = vsel %vm1138, %v1126, %v1174
    %v1187 = vsel %vm1139, %v1127, %v1175
    %1188 = vst [vmem:[%s4] sm:$0xff] %v1176
    %1189 = vst [vmem:[%s4 + $0x8] sm:$0xff] %v1177
    %1190 = vst [vmem:[%s4 + $0x10] sm:$0xff] %v1178
    %1191 = vst [vmem:[%s4 + $0x18] sm:$0xff] %v1179
    %1192 = vst [vmem:[%s4 + $0x20] sm:$0xff] %v1180
    %1193 = vst [vmem:[%s4 + $0x28] sm:$0xff] %v1181
    %1194 = vst [vmem:[%s4 + $0x30] sm:$0xff] %v1182
    %1195 = vst [vmem:[%s4 + $0x38] sm:$0xff] %v1183
    %1196 = vst [vmem:[%s4 + $0x40] sm:$0xff] %v1184
    %1197 = vst [vmem:[%s4 + $0x48] sm:$0xff] %v1185
    %1198 = vst [vmem:[%s4 + $0x50] sm:$0xff] %v1186
    %1199 = vst [vmem:[%s4 + $0x58] sm:$0xff] %v1187
  $region25: #{core_wrapper_forward.3} parent=0 // pred_fallthru
    _
  // Predicated region
  $region26: #{core_wrapper_forward.3} parent=0 // pred_check
    _
  $region27: #{core_wrapper_forward.3} parent=0 // pred_check_branch
    %1201 = sbr.rel (0) target = $region29
  $region28: #{core_wrapper_forward.3} parent=0 // pred_region
    _
  $region29: #{core_wrapper_forward.3} parent=0 // pred_fallthru
    _
  // Predicated region
  $region30: #{core_wrapper_forward.3} parent=0 // pred_check
    _
  $region31: #{core_wrapper_forward.3} parent=0 // pred_check_branch
    %1203 = sbr.rel (0) target = $region33
  $region32: #{core_wrapper_forward.3} parent=0 // pred_region
    _
  $region33: #{core_wrapper_forward.3} parent=0 // pred_fallthru
    _

</llo_original>
